<compile_context>
chip_gen: v7x
topology: tpu7x:2x2x1
jax: 0.10.0
libtpu: 0.0.40
codegen_flags: <defaults>
</compile_context>

<pallas_src>
import functools
import math

import jax
import jax.numpy as jnp
from jax.experimental import pallas as pl
from jax.experimental.pallas import tpu as pltpu

WINDOW_SIZE = 11
SIGMA = 1.5
PAD = WINDOW_SIZE // 2
C1 = 0.01 ** 2
C2 = 0.03 ** 2


def _gaussian_1d(window_size=WINDOW_SIZE, sigma=SIGMA):
    """Normalized 1-D Gaussian taps (same as create_window's 1-D factor)."""
    g = [math.exp(-((x - window_size // 2) ** 2) / (2.0 * sigma ** 2))
         for x in range(window_size)]
    s = sum(g)
    return [v / s for v in g]


def _gauss_band_matrix(n, g1d, pad):
    """(n, n) banded matrix B with B[w, j] = g1d[w - j + pad]:
    `x @ B` == 'same' zero-padded 1-D Gaussian conv of x along its last axis."""
    ws = len(g1d)
    return [[(g1d[w - j + pad] if 0 <= w - j + pad < ws else 0.0)
             for j in range(n)] for w in range(n)]


def _ssim_kernel(x1_ref, x2_ref, gh_ref, out_ref, *, blk, h, hp, w, gv):
    # x1_ref / x2_ref: (blk, hp, w) — blk images, H zero-padded to hp (>= h+10,
    # multiple of 8 so the 3D<->2D reshapes below are sublane-aligned).
    x1 = jnp.clip(x1_ref[...], 0.0, 1.0)
    x2 = jnp.clip(x2_ref[...], 0.0, 1.0)

    # Products computed once; stack the 5 conv inputs along M.
    stacked = jnp.concatenate([x1, x2, x1 * x1, x2 * x2, x1 * x2],
                              axis=0)                      # (5*blk, hp, w)

    # W-direction pass of the separable Gaussian on the MXU.  gh encodes the
    # "same" zero-padding along W, so no lane-unaligned slices are needed.
    y = jnp.dot(stacked.reshape(5 * blk * hp, w), gh_ref[...],
                preferred_element_type=jnp.float32)
    y = y.reshape(5 * blk, hp, w)

    # H-direction pass: 11 sublane-shifted MACs on the VPU.  The zero halo
    # rows come from the wrapper's H padding, so boundary handling is exact.
    acc = gv[0] * y[:, 0:h, :]
    for ky in range(1, WINDOW_SIZE):
        acc = acc + gv[ky] * y[:, ky:ky + h, :]

    mu1 = acc[0 * blk:1 * blk]
    mu2 = acc[1 * blk:2 * blk]
    e11 = acc[2 * blk:3 * blk]
    e22 = acc[3 * blk:4 * blk]
    e12 = acc[4 * blk:5 * blk]

    mu1_sq = mu1 * mu1
    mu2_sq = mu2 * mu2
    mu1_mu2 = mu1 * mu2
    sigma1_sq = e11 - mu1_sq
    sigma2_sq = e22 - mu2_sq
    sigma12 = e12 - mu1_mu2

    ssim_map = ((2.0 * mu1_mu2 + C1) * (2.0 * sigma12 + C2)) / (
        (mu1_sq + mu2_sq + C1) * (sigma1_sq + sigma2_sq + C2))
    ssim_map = jnp.clip(ssim_map, 0.0, 1.0)

    # Per-image spatial sums, written as one lane-contiguous row per step.
    sums = jnp.sum(jnp.sum(ssim_map, axis=2), axis=1)       # (blk,)
    out_ref[...] = sums.reshape(1, 1, blk)


def custom_ssim_loss(img1, img2, window_size=WINDOW_SIZE, size_average=True):
    """JAX/Pallas equivalent of CustomSSIM.forward (returns the loss)."""
    assert window_size == WINDOW_SIZE
    B, C, H, W = img1.shape
    N = B * C
    pad = window_size // 2
    Hp = ((H + 2 * pad + 7) // 8) * 8      # H halo, aligned to 8 sublanes

    # Images per grid step: large enough to amortize per-step overhead and
    # give the MXU a big M, small enough to fit VMEM on every generation
    # (v7x: 64 MiB physical), and grid >= 2 so both v7x TensorCores work.
    bytes_per_img = 4 * W * (14 * Hp + 12 * H)       # rough per-image live set
    blk_cap = max(1, (16 * 1024 * 1024) // bytes_per_img)
    BLK = int(max(1, min(8, blk_cap, -(-N // 2))))
    G = -(-N // BLK)
    Npad = G * BLK

    x1 = img1.astype(jnp.float32).reshape(N, H, W)
    x2 = img2.astype(jnp.float32).reshape(N, H, W)
    padding = ((0, Npad - N), (pad, Hp - H - pad), (0, 0))
    # TODO(synk): the small H-halo pad could be fused into the kernel via a
    # zero-initialized VMEM scratch to avoid this extra HBM copy entirely.
    x1 = jnp.pad(x1, padding)
    x2 = jnp.pad(x2, padding)

    g1d = _gaussian_1d(window_size, SIGMA)
    gh = jnp.asarray(_gauss_band_matrix(W, g1d, pad), jnp.float32)

    kernel = functools.partial(_ssim_kernel, blk=BLK, h=H, hp=Hp, w=W, gv=g1d)
    sums = pl.pallas_call(
        kernel,
        out_shape=jax.ShapeDtypeStruct((G, 1, BLK), jnp.float32),
        grid=(G,),
        in_specs=[
            pl.BlockSpec((BLK, Hp, W), lambda i: (i, 0, 0)),
            pl.BlockSpec((BLK, Hp, W), lambda i: (i, 0, 0)),
            pl.BlockSpec((W, W), lambda i: (0, 0)),
        ],
        out_specs=pl.BlockSpec((1, 1, BLK), lambda i: (i, 0, 0)),
        compiler_params=pltpu.CompilerParams(
            dimension_semantics=("parallel",),
            vmem_limit_bytes=32 * 1024 * 1024),
    )(x1, x2, gh)

    per_img = sums.reshape(Npad)[:N]       # drop sums of batch-padding images
    if size_average:
        ssim_value = jnp.sum(per_img) / (N * H * W)
    else:
        # mean(1).mean(1).mean(1) == mean over (C, H, W) per batch element
        ssim_value = jnp.sum(per_img.reshape(B, C), axis=1) / (C * H * W)
    return jnp.maximum(1.0 - ssim_value, 0.0)


def _ssim_loss_ref(img1, img2, window_size=WINDOW_SIZE, size_average=True):
    """Pure-JAX reference mirroring the PyTorch module."""
    B, C, H, W = img1.shape
    pad = window_size // 2
    img1 = jnp.clip(img1.astype(jnp.float32), 0.0, 1.0)
    img2 = jnp.clip(img2.astype(jnp.float32), 0.0, 1.0)
    g1d = jnp.asarray(_gaussian_1d(window_size, SIGMA), jnp.float32)
    win2d = g1d[:, None] * g1d[None, :]
    w = jnp.broadcast_to(win2d[None, None], (C, 1, window_size, window_size))

    def conv(x):
        return jax.lax.conv_general_dilated(
            x, w, (1, 1), [(pad, pad), (pad, pad)],
            feature_group_count=C,
            dimension_numbers=("NCHW", "OIHW", "NCHW"))

    mu1, mu2 = conv(img1), conv(img2)
    mu1_sq, mu2_sq, mu1_mu2 = mu1 * mu1, mu2 * mu2, mu1 * mu2
    sigma1_sq = conv(img1 * img1) - mu1_sq
    sigma2_sq = conv(img2 * img2) - mu2_sq
    sigma12 = conv(img1 * img2) - mu1_mu2
    ssim_map = ((2 * mu1_mu2 + C1) * (2 * sigma12 + C2)) / (
        (mu1_sq + mu2_sq + C1) * (sigma1_sq + sigma2_sq + C2))
    ssim_map = jnp.clip(ssim_map, 0.0, 1.0)
    if size_average:
        ssim_value = jnp.mean(ssim_map)
    else:
        ssim_value = ssim_map.mean(axis=(1, 2, 3))
    return jnp.maximum(1.0 - ssim_value, 0.0)


if __name__ == "__main__":
    key = jax.random.PRNGKey(0)
    k1, k2 = jax.random.split(key)
    B, C, H, W = 2, 4, 16, 16
    img1 = jax.random.uniform(k1, (B, C, H, W), dtype=jnp.float32)
    img2 = jnp.clip(img1 + 0.1 * jax.random.normal(k2, (B, C, H, W), jnp.float32),
                    0.0, 1.0)

    loss = custom_ssim_loss(img1, img2)
    jax.block_until_ready(loss)
    ref = _ssim_loss_ref(img1, img2)
    assert abs(float(loss) - float(ref)) < 1e-4, (float(loss), float(ref))

    loss_b = custom_ssim_loss(img1, img2, size_average=False)
    jax.block_until_ready(loss_b)
    ref_b = _ssim_loss_ref(img1, img2, size_average=False)
    assert float(jnp.max(jnp.abs(loss_b - ref_b))) < 1e-4

    print("KERNEL_OK")
</pallas_src>

<mosaic_0001>
module attributes {stable_mosaic.version = 11 : i64} {
  func.func @_ssim_kernel(%arg0: i32, %arg1: memref<4x32x16xf32, #tpu.memory_space<vmem>>, %arg2: memref<4x32x16xf32, #tpu.memory_space<vmem>>, %arg3: memref<16x16xf32, #tpu.memory_space<vmem>>, %arg4: memref<1x1x4xf32, #tpu.memory_space<vmem>>) attributes {dimension_semantics = [#tpu.dimension_semantics<parallel>], iteration_bounds = array<i64: 2>, scalar_prefetch = 0 : i64, scratch_operands = 0 : i64, tpu.core_type = #tpu.core_type<tc>, window_params = [{transform_indices = @transform_0, window_bounds = array<i64: 4, 32, 16>}, {transform_indices = @transform_1, window_bounds = array<i64: 4, 32, 16>}, {pipeline_mode = #tpu.pipeline_mode<synchronous>, transform_indices = @transform_2, window_bounds = array<i64: 16, 16>}, {transform_indices = @transform_3, window_bounds = array<i64: 1, 1, 4>}]} {
    %c0 = arith.constant 0 : index
    %c0_0 = arith.constant 0 : index
    %c0_1 = arith.constant 0 : index
    %0 = vector.load %arg1[%c0, %c0_0, %c0_1] : memref<4x32x16xf32, #tpu.memory_space<vmem>>, vector<4x32x16xf32>
    %cst = arith.constant 0.000000e+00 : f32
    %cst_2 = arith.constant 1.000000e+00 : f32
    %1 = vector.broadcast %cst : f32 to vector<4x32x16xf32>
    %2 = arith.maximumf %1, %0 : vector<4x32x16xf32>
    %3 = vector.broadcast %cst_2 : f32 to vector<4x32x16xf32>
    %4 = arith.minimumf %3, %2 : vector<4x32x16xf32>
    %c0_3 = arith.constant 0 : index
    %c0_4 = arith.constant 0 : index
    %c0_5 = arith.constant 0 : index
    %5 = vector.load %arg2[%c0_3, %c0_4, %c0_5] : memref<4x32x16xf32, #tpu.memory_space<vmem>>, vector<4x32x16xf32>
    %cst_6 = arith.constant 0.000000e+00 : f32
    %cst_7 = arith.constant 1.000000e+00 : f32
    %6 = vector.broadcast %cst_6 : f32 to vector<4x32x16xf32>
    %7 = arith.maximumf %6, %5 : vector<4x32x16xf32>
    %8 = vector.broadcast %cst_7 : f32 to vector<4x32x16xf32>
    %9 = arith.minimumf %8, %7 : vector<4x32x16xf32>
    %10 = arith.mulf %4, %4 : vector<4x32x16xf32>
    %11 = arith.mulf %9, %9 : vector<4x32x16xf32>
    %12 = arith.mulf %4, %9 : vector<4x32x16xf32>
    %13 = tpu.concatenate %4, %9, %10, %11, %12 in 0 : vector<4x32x16xf32>, vector<4x32x16xf32>, vector<4x32x16xf32>, vector<4x32x16xf32>, vector<4x32x16xf32> -> vector<20x32x16xf32>
    %14 = vector.shape_cast %13 : vector<20x32x16xf32> to vector<640x16xf32>
    %c0_8 = arith.constant 0 : index
    %c0_9 = arith.constant 0 : index
    %15 = vector.load %arg3[%c0_8, %c0_9] : memref<16x16xf32, #tpu.memory_space<vmem>>, vector<16x16xf32>
    %cst_10 = arith.constant dense<0.000000e+00> : vector<640x16xf32>
    %16 = tpu.matmul %14, %15, %cst_10 {dimension_numbers = #tpu.dot_dimension_numbers<[1], [0], [0], [1], [0, 0, 1, 1], [], []>} : vector<640x16xf32>, vector<16x16xf32>, vector<640x16xf32> -> vector<640x16xf32>
    %17 = vector.shape_cast %16 : vector<640x16xf32> to vector<20x32x16xf32>
    %18 = vector.extract_strided_slice %17 {offsets = [0, 0, 0], sizes = [20, 16, 16], strides = [1, 1, 1]} : vector<20x32x16xf32> to vector<20x16x16xf32>
    %cst_11 = arith.constant 0.00102838012 : f32
    %19 = vector.broadcast %cst_11 : f32 to vector<20x16x16xf32>
    %20 = arith.mulf %19, %18 : vector<20x16x16xf32>
    %21 = vector.extract_strided_slice %17 {offsets = [0, 1, 0], sizes = [20, 16, 16], strides = [1, 1, 1]} : vector<20x32x16xf32> to vector<20x16x16xf32>
    %cst_12 = arith.constant 0.00759875821 : f32
    %22 = vector.broadcast %cst_12 : f32 to vector<20x16x16xf32>
    %23 = arith.mulf %22, %21 : vector<20x16x16xf32>
    %24 = arith.addf %20, %23 : vector<20x16x16xf32>
    %25 = vector.extract_strided_slice %17 {offsets = [0, 2, 0], sizes = [20, 16, 16], strides = [1, 1, 1]} : vector<20x32x16xf32> to vector<20x16x16xf32>
    %cst_13 = arith.constant 0.0360007733 : f32
    %26 = vector.broadcast %cst_13 : f32 to vector<20x16x16xf32>
    %27 = arith.mulf %26, %25 : vector<20x16x16xf32>
    %28 = arith.addf %24, %27 : vector<20x16x16xf32>
    %29 = vector.extract_strided_slice %17 {offsets = [0, 3, 0], sizes = [20, 16, 16], strides = [1, 1, 1]} : vector<20x32x16xf32> to vector<20x16x16xf32>
    %cst_14 = arith.constant 0.109360687 : f32
    %30 = vector.broadcast %cst_14 : f32 to vector<20x16x16xf32>
    %31 = arith.mulf %30, %29 : vector<20x16x16xf32>
    %32 = arith.addf %28, %31 : vector<20x16x16xf32>
    %33 = vector.extract_strided_slice %17 {offsets = [0, 4, 0], sizes = [20, 16, 16], strides = [1, 1, 1]} : vector<20x32x16xf32> to vector<20x16x16xf32>
    %cst_15 = arith.constant 0.213005543 : f32
    %34 = vector.broadcast %cst_15 : f32 to vector<20x16x16xf32>
    %35 = arith.mulf %34, %33 : vector<20x16x16xf32>
    %36 = arith.addf %32, %35 : vector<20x16x16xf32>
    %37 = vector.extract_strided_slice %17 {offsets = [0, 5, 0], sizes = [20, 16, 16], strides = [1, 1, 1]} : vector<20x32x16xf32> to vector<20x16x16xf32>
    %cst_16 = arith.constant 0.266011715 : f32
    %38 = vector.broadcast %cst_16 : f32 to vector<20x16x16xf32>
    %39 = arith.mulf %38, %37 : vector<20x16x16xf32>
    %40 = arith.addf %36, %39 : vector<20x16x16xf32>
    %41 = vector.extract_strided_slice %17 {offsets = [0, 6, 0], sizes = [20, 16, 16], strides = [1, 1, 1]} : vector<20x32x16xf32> to vector<20x16x16xf32>
    %cst_17 = arith.constant 0.213005543 : f32
    %42 = vector.broadcast %cst_17 : f32 to vector<20x16x16xf32>
    %43 = arith.mulf %42, %41 : vector<20x16x16xf32>
    %44 = arith.addf %40, %43 : vector<20x16x16xf32>
    %45 = vector.extract_strided_slice %17 {offsets = [0, 7, 0], sizes = [20, 16, 16], strides = [1, 1, 1]} : vector<20x32x16xf32> to vector<20x16x16xf32>
    %cst_18 = arith.constant 0.109360687 : f32
    %46 = vector.broadcast %cst_18 : f32 to vector<20x16x16xf32>
    %47 = arith.mulf %46, %45 : vector<20x16x16xf32>
    %48 = arith.addf %44, %47 : vector<20x16x16xf32>
    %49 = vector.extract_strided_slice %17 {offsets = [0, 8, 0], sizes = [20, 16, 16], strides = [1, 1, 1]} : vector<20x32x16xf32> to vector<20x16x16xf32>
    %cst_19 = arith.constant 0.0360007733 : f32
    %50 = vector.broadcast %cst_19 : f32 to vector<20x16x16xf32>
    %51 = arith.mulf %50, %49 : vector<20x16x16xf32>
    %52 = arith.addf %48, %51 : vector<20x16x16xf32>
    %53 = vector.extract_strided_slice %17 {offsets = [0, 9, 0], sizes = [20, 16, 16], strides = [1, 1, 1]} : vector<20x32x16xf32> to vector<20x16x16xf32>
    %cst_20 = arith.constant 0.00759875821 : f32
    %54 = vector.broadcast %cst_20 : f32 to vector<20x16x16xf32>
    %55 = arith.mulf %54, %53 : vector<20x16x16xf32>
    %56 = arith.addf %52, %55 : vector<20x16x16xf32>
    %57 = vector.extract_strided_slice %17 {offsets = [0, 10, 0], sizes = [20, 16, 16], strides = [1, 1, 1]} : vector<20x32x16xf32> to vector<20x16x16xf32>
    %cst_21 = arith.constant 0.00102838012 : f32
    %58 = vector.broadcast %cst_21 : f32 to vector<20x16x16xf32>
    %59 = arith.mulf %58, %57 : vector<20x16x16xf32>
    %60 = arith.addf %56, %59 : vector<20x16x16xf32>
    %61 = vector.extract_strided_slice %60 {offsets = [0, 0, 0], sizes = [4, 16, 16], strides = [1, 1, 1]} : vector<20x16x16xf32> to vector<4x16x16xf32>
    %62 = vector.extract_strided_slice %60 {offsets = [4, 0, 0], sizes = [4, 16, 16], strides = [1, 1, 1]} : vector<20x16x16xf32> to vector<4x16x16xf32>
    %63 = vector.extract_strided_slice %60 {offsets = [8, 0, 0], sizes = [4, 16, 16], strides = [1, 1, 1]} : vector<20x16x16xf32> to vector<4x16x16xf32>
    %64 = vector.extract_strided_slice %60 {offsets = [12, 0, 0], sizes = [4, 16, 16], strides = [1, 1, 1]} : vector<20x16x16xf32> to vector<4x16x16xf32>
    %65 = vector.extract_strided_slice %60 {offsets = [16, 0, 0], sizes = [4, 16, 16], strides = [1, 1, 1]} : vector<20x16x16xf32> to vector<4x16x16xf32>
    %66 = arith.mulf %61, %61 : vector<4x16x16xf32>
    %67 = arith.mulf %62, %62 : vector<4x16x16xf32>
    %68 = arith.mulf %61, %62 : vector<4x16x16xf32>
    %69 = arith.subf %63, %66 : vector<4x16x16xf32>
    %70 = arith.subf %64, %67 : vector<4x16x16xf32>
    %71 = arith.subf %65, %68 : vector<4x16x16xf32>
    %cst_22 = arith.constant 2.000000e+00 : f32
    %72 = vector.broadcast %cst_22 : f32 to vector<4x16x16xf32>
    %73 = arith.mulf %72, %68 : vector<4x16x16xf32>
    %cst_23 = arith.constant 9.99999974E-5 : f32
    %74 = vector.broadcast %cst_23 : f32 to vector<4x16x16xf32>
    %75 = arith.addf %73, %74 : vector<4x16x16xf32>
    %cst_24 = arith.constant 2.000000e+00 : f32
    %76 = vector.broadcast %cst_24 : f32 to vector<4x16x16xf32>
    %77 = arith.mulf %76, %71 : vector<4x16x16xf32>
    %cst_25 = arith.constant 8.99999984E-4 : f32
    %78 = vector.broadcast %cst_25 : f32 to vector<4x16x16xf32>
    %79 = arith.addf %77, %78 : vector<4x16x16xf32>
    %80 = arith.mulf %75, %79 : vector<4x16x16xf32>
    %81 = arith.addf %66, %67 : vector<4x16x16xf32>
    %cst_26 = arith.constant 9.99999974E-5 : f32
    %82 = vector.broadcast %cst_26 : f32 to vector<4x16x16xf32>
    %83 = arith.addf %81, %82 : vector<4x16x16xf32>
    %84 = arith.addf %69, %70 : vector<4x16x16xf32>
    %cst_27 = arith.constant 8.99999984E-4 : f32
    %85 = vector.broadcast %cst_27 : f32 to vector<4x16x16xf32>
    %86 = arith.addf %84, %85 : vector<4x16x16xf32>
    %87 = arith.mulf %83, %86 : vector<4x16x16xf32>
    %88 = arith.divf %80, %87 : vector<4x16x16xf32>
    %cst_28 = arith.constant 0.000000e+00 : f32
    %cst_29 = arith.constant 1.000000e+00 : f32
    %89 = vector.broadcast %cst_28 : f32 to vector<4x16x16xf32>
    %90 = arith.maximumf %89, %88 : vector<4x16x16xf32>
    %91 = vector.broadcast %cst_29 : f32 to vector<4x16x16xf32>
    %92 = arith.minimumf %91, %90 : vector<4x16x16xf32>
    %cst_30 = arith.constant dense<0.000000e+00> : vector<4x16xf32>
    %93 = vector.multi_reduction <add>, %92, %cst_30 [2] : vector<4x16x16xf32> to vector<4x16xf32>
    %cst_31 = arith.constant dense<0.000000e+00> : vector<4xf32>
    %94 = vector.multi_reduction <add>, %93, %cst_31 [1] : vector<4x16xf32> to vector<4xf32>
    %95 = vector.shape_cast %94 : vector<4xf32> to vector<1x1x4xf32>
    %c0_32 = arith.constant 0 : index
    %c0_33 = arith.constant 0 : index
    %c0_34 = arith.constant 0 : index
    %96 = vector.load %arg4[%c0_32, %c0_33, %c0_34] : memref<1x1x4xf32, #tpu.memory_space<vmem>>, vector<1x1x4xf32>
    tpu.vector_store %arg4[%c0_32, %c0_33, %c0_34], %95 {strides = array<i32>} : memref<1x1x4xf32, #tpu.memory_space<vmem>>, vector<1x1x4xf32>,
    return
  }
  func.func @transform_0(%arg0: i32) -> (i32, i32, i32) {
    %c0_i32 = arith.constant 0 : i32
    %c0_i32_0 = arith.constant 0 : i32
    %c0_i32_1 = arith.constant 0 : i32
    return %arg0, %c0_i32, %c0_i32_0 : i32, i32, i32
  }
  func.func @transform_1(%arg0: i32) -> (i32, i32, i32) {
    %c0_i32 = arith.constant 0 : i32
    %c0_i32_0 = arith.constant 0 : i32
    %c0_i32_1 = arith.constant 0 : i32
    return %arg0, %c0_i32, %c0_i32_0 : i32, i32, i32
  }
  func.func @transform_2(%arg0: i32) -> (i32, i32) {
    %c0_i32 = arith.constant 0 : i32
    %c0_i32_0 = arith.constant 0 : i32
    %c0_i32_1 = arith.constant 0 : i32
    return %c0_i32, %c0_i32_0 : i32, i32
  }
  func.func @transform_3(%arg0: i32) -> (i32, i32, i32) {
    %c0_i32 = arith.constant 0 : i32
    %c0_i32_0 = arith.constant 0 : i32
    %c0_i32_1 = arith.constant 0 : i32
    return %arg0, %c0_i32, %c0_i32_0 : i32, i32, i32
  }
}

</mosaic_0001>

<llo_original>
// kernel: tpu_custom_call.1
$region0: #{tpu_custom_call.1}
  #allocation0 [shape = 'u32[]', space=smem, size = 0x4, offset = 0x4, fixed_abs, tag = 'smem constant byte address 0x4 - core index']
  #allocation1 [shape = 'u32[144,128]{1,0:T(1,128)}', space=vmem, size = 0x12000, scoped, tag = 'internal scratch']
  %s0 = inlined_call_operand.vmem [shape: f32[8,32,16], index: 0, kind: input, shape index: {}]
  %s1 = inlined_call_operand.vmem [shape: f32[8,32,16], index: 1, kind: input, shape index: {}]
  %s2 = inlined_call_operand.vmem [shape: f32[16,16], index: 2, kind: input, shape index: {}]
  %s3 = inlined_call_operand.hbm [shape: f32[2,1,4], index: 3, kind: output, shape index: {}]
  %s4 = sld [smem:[#allocation0]]
  $region45: #{tpu_custom_call.1} parent=0
    _
  %s6 = ssub.s32 1, %s4
  %s7 = scalar_select 0, %s6, %s4
  $region1: #{tpu_custom_call.1} parent=0
    #allocation2 [shape = 'u8[1024]{0}', space=vmem, size = 0x400, scoped, tag = 'output window, operand 0']
    #allocation3 [shape = 's32[2]{0}', space=sflag, size = 0x8, scoped, tag = 'scoped memory for tpu_custom_call.1']
    %8 = vsyncpa [#allocation3], 0
    %s9 = scalar_lea.sflag [#allocation3], 1
    %10 = vsyncpa %s9, 0
    loop: start=0, step=1, limit=4
    $region2: #{tpu_custom_call.1} parent=1 // loop_pre_header
      _
    $region3: #{tpu_custom_call.1} parent=1 // loop_header
      %s12 = sphi 0, %s16
      %p13 = scmp.ge.s32.totalorder %s12, 4
      %s22 = sphi 0, %s24
      %s25 = sphi 0, %s22
      %s26 = sphi 0, %s25
      %s42 = sphi 0, %s26
      %s48 = sphi 0, %s50
      %s51 = sphi 0, %s48
      %s52 = sphi 0, %s51
      %s68 = sphi 0, %s52
      %s72 = sphi 0, %s72
      %s74 = sphi 0, %s72
      %s75 = sphi 0, %s74
      %s89 = sphi 0, %s75
      %s95 = sphi 0, %s97
      %s98 = sphi 0, %s95
      %s99 = sphi 0, %s98
      %s115 = sphi 0, %s99
    $region4: #{tpu_custom_call.1} parent=1 // loop_header_branch
      %15 = sbr.rel (%p13) target = $region8
    $region5: #{tpu_custom_call.1} parent=1 // loop_body
      %s17 = ssub.s32 %s12, 1
      %s18 = ssub.s32 %s12, 2
      %s19 = sadd.s32 %s12, 1
      %s20 = ssub.s32 %s12, %s19
      %p21 = scmp.eq.s32.totalorder %s20, 0
      %s23 = sadd.s32 %s22, 1
      %s24 = scalar_select %p21, %s22, %s23
      %p27 = pneg %p21
      %p28 = scmp.eq.s32.totalorder %s12, 1
      %p29 = por %p27, %p28
      %p30 = scmp.ne.s32.totalorder %s22, %s25
      %p31 = scmp.eq.s32.totalorder %s12, 0
      %p32 = por %p30, %p31
      %p33 = scmp.ne.s32.totalorder %s22, %s25
      %p34 = scmp.eq.s32.totalorder %s17, 1
      %p35 = por %p33, %p34
      %p36 = scmp.ne.s32.totalorder %s25, %s26
      %p37 = scmp.eq.s32.totalorder %s17, 0
      %p38 = por %p36, %p37
      %p39 = scmp.ne.s32.totalorder %s25, %s26
      %p40 = scmp.eq.s32.totalorder %s18, 1
      %p41 = por %p39, %p40
      %p43 = scmp.ne.s32.totalorder %s26, %s42
      %p44 = scmp.eq.s32.totalorder %s18, 0
      %p45 = por %p43, %p44
      %s46 = ssub.s32 %s12, %s19
      %p47 = scmp.eq.s32.totalorder %s46, 0
      %s49 = sadd.s32 %s48, 1
      %s50 = scalar_select %p47, %s48, %s49
      %p53 = pneg %p47
      %p54 = scmp.eq.s32.totalorder %s12, 1
      %p55 = por %p53, %p54
      %p56 = scmp.ne.s32.totalorder %s48, %s51
      %p57 = scmp.eq.s32.totalorder %s12, 0
      %p58 = por %p56, %p57
      %p59 = scmp.ne.s32.totalorder %s48, %s51
      %p60 = scmp.eq.s32.totalorder %s17, 1
      %p61 = por %p59, %p60
      %p62 = scmp.ne.s32.totalorder %s51, %s52
      %p63 = scmp.eq.s32.totalorder %s17, 0
      %p64 = por %p62, %p63
      %p65 = scmp.ne.s32.totalorder %s51, %s52
      %p66 = scmp.eq.s32.totalorder %s18, 1
      %p67 = por %p65, %p66
      %p69 = scmp.ne.s32.totalorder %s52, %s68
      %p70 = scmp.eq.s32.totalorder %s18, 0
      %p71 = por %p69, %p70
      %s73 = sadd.s32 %s72, 1
      %p76 = scmp.eq.s32.totalorder %s12, 1
      %p77 = scmp.ne.s32.totalorder %s72, %s74
      %p78 = scmp.eq.s32.totalorder %s12, 0
      %p79 = por %p77, %p78
      %p80 = scmp.ne.s32.totalorder %s72, %s74
      %p81 = scmp.eq.s32.totalorder %s17, 1
      %p82 = por %p80, %p81
      %p83 = scmp.ne.s32.totalorder %s74, %s75
      %p84 = scmp.eq.s32.totalorder %s17, 0
      %p85 = por %p83, %p84
      %p86 = scmp.ne.s32.totalorder %s74, %s75
      %p87 = scmp.eq.s32.totalorder %s18, 1
      %p88 = por %p86, %p87
      %p90 = scmp.ne.s32.totalorder %s75, %s89
      %p91 = scmp.eq.s32.totalorder %s18, 0
      %p92 = por %p90, %p91
      %s93 = ssub.s32 %s12, %s19
      %p94 = scmp.eq.s32.totalorder %s93, 0
      %s96 = sadd.s32 %s95, 1
      %s97 = scalar_select %p94, %s95, %s96
      %p100 = pneg %p94
      %p101 = scmp.eq.s32.totalorder %s12, 1
      %p102 = por %p100, %p101
      %p103 = scmp.ne.s32.totalorder %s95, %s98
      %p104 = scmp.eq.s32.totalorder %s12, 0
      %p105 = por %p103, %p104
      %p106 = scmp.ne.s32.totalorder %s95, %s98
      %p107 = scmp.eq.s32.totalorder %s17, 1
      %p108 = por %p106, %p107
      %p109 = scmp.ne.s32.totalorder %s98, %s99
      %p110 = scmp.eq.s32.totalorder %s17, 0
      %p111 = por %p109, %p110
      %p112 = scmp.ne.s32.totalorder %s98, %s99
      %p113 = scmp.eq.s32.totalorder %s18, 1
      %p114 = por %p112, %p113
      %p116 = scmp.ne.s32.totalorder %s99, %s115
      %p117 = scmp.eq.s32.totalorder %s18, 0
      %p118 = por %p116, %p117
      %p119 = scmp.le.s32.totalorder 1, %s12
      %p120 = scmp.lt.s32.totalorder %s12, 3
      %p121 = pnand %p119, %p120
      %p122 = pneg %p121
      // Predicated region
      $region9: #{tpu_custom_call.1} parent=5 // pred_check
        _
      $region10: #{tpu_custom_call.1} parent=5 // pred_check_branch
        %124 = sbr.rel (%p121) target = $region12
      $region11: #{tpu_custom_call.1} parent=5 // pred_region
        %s125 = ssub.s32 %s12, 1
        // Predicated region
        $region13: #{tpu_custom_call.1} parent=11 // pred_check
          %p126 = pneg %p85
        $region14: #{tpu_custom_call.1} parent=11 // pred_check_branch
          %128 = sbr.rel (%p126) target = $region16
        $region15: #{tpu_custom_call.1} parent=11 // pred_region
          _
        $region16: #{tpu_custom_call.1} parent=11 // pred_fallthru
          _
      $region12: #{tpu_custom_call.1} parent=5 // pred_fallthru
        _
      %p129 = scmp.lt.s32.totalorder %s12, 2
      // Predicated region
      $region17: #{tpu_custom_call.1} parent=5 // pred_check
        %p130 = pneg %p129
      $region18: #{tpu_custom_call.1} parent=5 // pred_check_branch
        %132 = sbr.rel (%p130) target = $region20
      $region19: #{tpu_custom_call.1} parent=5 // pred_region
        // Predicated region
        $region21: #{tpu_custom_call.1} parent=19 // pred_check
          %p133 = pneg %p32
        $region22: #{tpu_custom_call.1} parent=19 // pred_check_branch
          %135 = sbr.rel (%p133) target = $region24
        $region23: #{tpu_custom_call.1} parent=19 // pred_region
          %s136 = smul.u32 4, %s12
          %p137 = scmp.lt.s32.totalorder %s136, 7
          %s138 = scalar_select %p137, %s136, 7
          %s139 = smul.addr %s138, 4
          %s140 = smul.addr %s139, 8
          %s141 = scalar_lea.vmem %s0, %s140
          %s142 = smul.u32 4, %s12
        $region24: #{tpu_custom_call.1} parent=19 // pred_fallthru
          _
        // Predicated region
        $region25: #{tpu_custom_call.1} parent=19 // pred_check
          %p143 = pneg %p58
        $region26: #{tpu_custom_call.1} parent=19 // pred_check_branch
          %145 = sbr.rel (%p143) target = $region28
        $region27: #{tpu_custom_call.1} parent=19 // pred_region
          %s146 = smul.u32 4, %s12
          %p147 = scmp.lt.s32.totalorder %s146, 7
          %s148 = scalar_select %p147, %s146, 7
          %s149 = smul.addr %s148, 4
          %s150 = smul.addr %s149, 8
          %s151 = scalar_lea.vmem %s1, %s150
          %s152 = smul.u32 4, %s12
        $region28: #{tpu_custom_call.1} parent=19 // pred_fallthru
          _
      $region20: #{tpu_custom_call.1} parent=5 // pred_fallthru
        _
      %p153 = scmp.le.s32.totalorder 1, %s12
      %p154 = scmp.lt.s32.totalorder %s12, 3
      %p155 = pnand %p153, %p154
      %p156 = pneg %p155
      // Predicated region
      $region29: #{tpu_custom_call.1} parent=5 // pred_check
        _
      $region30: #{tpu_custom_call.1} parent=5 // pred_check_branch
        %158 = sbr.rel (%p155) target = $region32
      $region31: #{tpu_custom_call.1} parent=5 // pred_region
        %s159 = ssub.s32 %s12, 1
        %s160 = smul.u32 4, %s17
        %p161 = scmp.lt.s32.totalorder %s160, 7
        %s162 = scalar_select %p161, %s160, 7
        %s163 = smul.addr %s162, 4
        %s164 = smul.addr %s163, 8
        %s165 = scalar_lea.vmem %s0, %s164
        %p166 = pneg %p38
        %p167 = pneg %p35
        %s168 = smul.u32 4, %s17
        %p169 = scmp.lt.s32.totalorder %s168, 7
        %s170 = scalar_select %p169, %s168, 7
        %s171 = smul.addr %s170, 4
        %s172 = smul.addr %s171, 8
        %s173 = scalar_lea.vmem %s1, %s172
        %p174 = pneg %p64
        %p175 = pneg %p61
        %p176 = pneg %p85
        %p177 = pneg %p82
        %p178 = pneg %p111
        %p179 = pneg %p108
        %s180 = sand.u32 %s98, 1
        %s181 = scalar_lea.sflag [#allocation3], %s180
        %s182 = sand.u32 %s98, 1
        %s183 = scalar_lea.vmem [#allocation2], %s182
        %s184 = smul.u32 4, %s17
        %p185 = scmp.lt.s32.totalorder %s184, 7
        %s186 = scalar_select %p185, %s184, 7
        %s187 = smul.addr %s186, 4
        %s188 = smul.addr %s187, 8
        %s189 = scalar_lea.vmem %s0, %s188
        %s190 = smul.u32 4, %s17
        %s191 = smul.u32 4, %s17
        %p192 = scmp.lt.s32.totalorder %s191, 7
        %s193 = scalar_select %p192, %s191, 7
        %s194 = smul.addr %s193, 4
        %s195 = smul.addr %s194, 8
        %s196 = scalar_lea.vmem %s1, %s195
        %s197 = smul.u32 4, %s17
        %v198 = vld [vmem:[%s189] sm:$0xff]
        %v199 = vld [vmem:[%s189 + $0x8] sm:$0xff]
        %v200 = vld [vmem:[%s189 + $0x10] sm:$0xff]
        %v201 = vld [vmem:[%s189 + $0x18] sm:$0xff]
        %v202 = vld [vmem:[%s189 + $0x20] sm:$0xff]
        %v203 = vld [vmem:[%s189 + $0x28] sm:$0xff]
        %v204 = vld [vmem:[%s189 + $0x30] sm:$0xff]
        %v205 = vld [vmem:[%s189 + $0x38] sm:$0xff]
        %v206 = vld [vmem:[%s189 + $0x40] sm:$0xff]
        %v207 = vld [vmem:[%s189 + $0x48] sm:$0xff]
        %v208 = vld [vmem:[%s189 + $0x50] sm:$0xff]
        %v209 = vld [vmem:[%s189 + $0x58] sm:$0xff]
        %v210 = vld [vmem:[%s189 + $0x60] sm:$0xff]
        %v211 = vld [vmem:[%s189 + $0x68] sm:$0xff]
        %v212 = vld [vmem:[%s189 + $0x70] sm:$0xff]
        %v213 = vld [vmem:[%s189 + $0x78] sm:$0xff]
        %v214 = vmax.f32 %v198, 0.0
        %v215 = vmax.f32 %v199, 0.0
        %v216 = vmax.f32 %v200, 0.0
        %v217 = vmax.f32 %v201, 0.0
        %v218 = vmax.f32 %v202, 0.0
        %v219 = vmax.f32 %v203, 0.0
        %v220 = vmax.f32 %v204, 0.0
        %v221 = vmax.f32 %v205, 0.0
        %v222 = vmax.f32 %v206, 0.0
        %v223 = vmax.f32 %v207, 0.0
        %v224 = vmax.f32 %v208, 0.0
        %v225 = vmax.f32 %v209, 0.0
        %v226 = vmax.f32 %v210, 0.0
        %v227 = vmax.f32 %v211, 0.0
        %v228 = vmax.f32 %v212, 0.0
        %v229 = vmax.f32 %v213, 0.0
        %v230 = vmin.f32 %v214, 1.0
        %v231 = vmin.f32 %v215, 1.0
        %v232 = vmin.f32 %v216, 1.0
        %v233 = vmin.f32 %v217, 1.0
        %v234 = vmin.f32 %v218, 1.0
        %v235 = vmin.f32 %v219, 1.0
        %v236 = vmin.f32 %v220, 1.0
        %v237 = vmin.f32 %v221, 1.0
        %v238 = vmin.f32 %v222, 1.0
        %v239 = vmin.f32 %v223, 1.0
        %v240 = vmin.f32 %v224, 1.0
        %v241 = vmin.f32 %v225, 1.0
        %v242 = vmin.f32 %v226, 1.0
        %v243 = vmin.f32 %v227, 1.0
        %v244 = vmin.f32 %v228, 1.0
        %v245 = vmin.f32 %v229, 1.0
        %v246 = vld [vmem:[%s196] sm:$0xff]
        %v247 = vld [vmem:[%s196 + $0x8] sm:$0xff]
        %v248 = vld [vmem:[%s196 + $0x10] sm:$0xff]
        %v249 = vld [vmem:[%s196 + $0x18] sm:$0xff]
        %v250 = vld [vmem:[%s196 + $0x20] sm:$0xff]
        %v251 = vld [vmem:[%s196 + $0x28] sm:$0xff]
        %v252 = vld [vmem:[%s196 + $0x30] sm:$0xff]
        %v253 = vld [vmem:[%s196 + $0x38] sm:$0xff]
        %v254 = vld [vmem:[%s196 + $0x40] sm:$0xff]
        %v255 = vld [vmem:[%s196 + $0x48] sm:$0xff]
        %v256 = vld [vmem:[%s196 + $0x50] sm:$0xff]
        %v257 = vld [vmem:[%s196 + $0x58] sm:$0xff]
        %v258 = vld [vmem:[%s196 + $0x60] sm:$0xff]
        %v259 = vld [vmem:[%s196 + $0x68] sm:$0xff]
        %v260 = vld [vmem:[%s196 + $0x70] sm:$0xff]
        %v261 = vld [vmem:[%s196 + $0x78] sm:$0xff]
        %v262 = vmax.f32 %v246, 0.0
        %v263 = vmax.f32 %v247, 0.0
        %v264 = vmax.f32 %v248, 0.0
        %v265 = vmax.f32 %v249, 0.0
        %v266 = vmax.f32 %v250, 0.0
        %v267 = vmax.f32 %v251, 0.0
        %v268 = vmax.f32 %v252, 0.0
        %v269 = vmax.f32 %v253, 0.0
        %v270 = vmax.f32 %v254, 0.0
        %v271 = vmax.f32 %v255, 0.0
        %v272 = vmax.f32 %v256, 0.0
        %v273 = vmax.f32 %v257, 0.0
        %v274 = vmax.f32 %v258, 0.0
        %v275 = vmax.f32 %v259, 0.0
        %v276 = vmax.f32 %v260, 0.0
        %v277 = vmax.f32 %v261, 0.0
        %v278 = vmin.f32 %v262, 1.0
        %v279 = vmin.f32 %v263, 1.0
        %v280 = vmin.f32 %v264, 1.0
        %v281 = vmin.f32 %v265, 1.0
        %v282 = vmin.f32 %v266, 1.0
        %v283 = vmin.f32 %v267, 1.0
        %v284 = vmin.f32 %v268, 1.0
        %v285 = vmin.f32 %v269, 1.0
        %v286 = vmin.f32 %v270, 1.0
        %v287 = vmin.f32 %v271, 1.0
        %v288 = vmin.f32 %v272, 1.0
        %v289 = vmin.f32 %v273, 1.0
        %v290 = vmin.f32 %v274, 1.0
        %v291 = vmin.f32 %v275, 1.0
        %v292 = vmin.f32 %v276, 1.0
        %v293 = vmin.f32 %v277, 1.0
        %v294 = vmul.f32 %v230, %v230
        %v295 = vmul.f32 %v231, %v231
        %v296 = vmul.f32 %v232, %v232
        %v297 = vmul.f32 %v233, %v233
        %v298 = vmul.f32 %v234, %v234
        %v299 = vmul.f32 %v235, %v235
        %v300 = vmul.f32 %v236, %v236
        %v301 = vmul.f32 %v237, %v237
        %v302 = vmul.f32 %v238, %v238
        %v303 = vmul.f32 %v239, %v239
        %v304 = vmul.f32 %v240, %v240
        %v305 = vmul.f32 %v241, %v241
        %v306 = vmul.f32 %v242, %v242
        %v307 = vmul.f32 %v243, %v243
        %v308 = vmul.f32 %v244, %v244
        %v309 = vmul.f32 %v245, %v245
        %v310 = vmul.f32 %v278, %v278
        %v311 = vmul.f32 %v279, %v279
        %v312 = vmul.f32 %v280, %v280
        %v313 = vmul.f32 %v281, %v281
        %v314 = vmul.f32 %v282, %v282
        %v315 = vmul.f32 %v283, %v283
        %v316 = vmul.f32 %v284, %v284
        %v317 = vmul.f32 %v285, %v285
        %v318 = vmul.f32 %v286, %v286
        %v319 = vmul.f32 %v287, %v287
        %v320 = vmul.f32 %v288, %v288
        %v321 = vmul.f32 %v289, %v289
        %v322 = vmul.f32 %v290, %v290
        %v323 = vmul.f32 %v291, %v291
        %v324 = vmul.f32 %v292, %v292
        %v325 = vmul.f32 %v293, %v293
        %v326 = vmul.f32 %v230, %v278
        %v327 = vmul.f32 %v231, %v279
        %v328 = vmul.f32 %v232, %v280
        %v329 = vmul.f32 %v233, %v281
        %v330 = vmul.f32 %v234, %v282
        %v331 = vmul.f32 %v235, %v283
        %v332 = vmul.f32 %v236, %v284
        %v333 = vmul.f32 %v237, %v285
        %v334 = vmul.f32 %v238, %v286
        %v335 = vmul.f32 %v239, %v287
        %v336 = vmul.f32 %v240, %v288
        %v337 = vmul.f32 %v241, %v289
        %v338 = vmul.f32 %v242, %v290
        %v339 = vmul.f32 %v243, %v291
        %v340 = vmul.f32 %v244, %v292
        %v341 = vmul.f32 %v245, %v293
        %v342 = vld [vmem:[%s2] sm:$0xff]
        %v343 = vld [vmem:[%s2 + $0x8] sm:$0xff]
        %vm344 = vcmask 130048
        %v346 = vsel %vm344, %v230, 0
        %v349 = vsel %vm344, %v231, 0
        %v352 = vsel %vm344, %v232, 0
        %v355 = vsel %vm344, %v233, 0
        %v358 = vsel %vm344, %v234, 0
        %v361 = vsel %vm344, %v235, 0
        %v364 = vsel %vm344, %v236, 0
        %v367 = vsel %vm344, %v237, 0
        %v370 = vsel %vm344, %v238, 0
        %v373 = vsel %vm344, %v239, 0
        %v376 = vsel %vm344, %v240, 0
        %v379 = vsel %vm344, %v241, 0
        %v382 = vsel %vm344, %v242, 0
        %v385 = vsel %vm344, %v243, 0
        %v388 = vsel %vm344, %v244, 0
        %v391 = vsel %vm344, %v245, 0
        %v394 = vsel %vm344, %v278, 0
        %v397 = vsel %vm344, %v279, 0
        %v400 = vsel %vm344, %v280, 0
        %v403 = vsel %vm344, %v281, 0
        %v406 = vsel %vm344, %v282, 0
        %v409 = vsel %vm344, %v283, 0
        %v412 = vsel %vm344, %v284, 0
        %v415 = vsel %vm344, %v285, 0
        %v418 = vsel %vm344, %v286, 0
        %v421 = vsel %vm344, %v287, 0
        %v424 = vsel %vm344, %v288, 0
        %v427 = vsel %vm344, %v289, 0
        %v430 = vsel %vm344, %v290, 0
        %v433 = vsel %vm344, %v291, 0
        %v436 = vsel %vm344, %v292, 0
        %v439 = vsel %vm344, %v293, 0
        %v442 = vsel %vm344, %v294, 0
        %v445 = vsel %vm344, %v295, 0
        %v448 = vsel %vm344, %v296, 0
        %v451 = vsel %vm344, %v297, 0
        %v454 = vsel %vm344, %v298, 0
        %v457 = vsel %vm344, %v299, 0
        %v460 = vsel %vm344, %v300, 0
        %v463 = vsel %vm344, %v301, 0
        %v466 = vsel %vm344, %v302, 0
        %v469 = vsel %vm344, %v303, 0
        %v472 = vsel %vm344, %v304, 0
        %v475 = vsel %vm344, %v305, 0
        %v478 = vsel %vm344, %v306, 0
        %v481 = vsel %vm344, %v307, 0
        %v484 = vsel %vm344, %v308, 0
        %v487 = vsel %vm344, %v309, 0
        %v490 = vsel %vm344, %v310, 0
        %v493 = vsel %vm344, %v311, 0
        %v496 = vsel %vm344, %v312, 0
        %v499 = vsel %vm344, %v313, 0
        %v502 = vsel %vm344, %v314, 0
        %v505 = vsel %vm344, %v315, 0
        %v508 = vsel %vm344, %v316, 0
        %v511 = vsel %vm344, %v317, 0
        %v514 = vsel %vm344, %v318, 0
        %v517 = vsel %vm344, %v319, 0
        %v520 = vsel %vm344, %v320, 0
        %v523 = vsel %vm344, %v321, 0
        %v526 = vsel %vm344, %v322, 0
        %v529 = vsel %vm344, %v323, 0
        %v532 = vsel %vm344, %v324, 0
        %v535 = vsel %vm344, %v325, 0
        %v538 = vsel %vm344, %v326, 0
        %v541 = vsel %vm344, %v327, 0
        %v544 = vsel %vm344, %v328, 0
        %v547 = vsel %vm344, %v329, 0
        %v550 = vsel %vm344, %v330, 0
        %v553 = vsel %vm344, %v331, 0
        %v556 = vsel %vm344, %v332, 0
        %v559 = vsel %vm344, %v333, 0
        %v562 = vsel %vm344, %v334, 0
        %v565 = vsel %vm344, %v335, 0
        %v568 = vsel %vm344, %v336, 0
        %v571 = vsel %vm344, %v337, 0
        %v574 = vsel %vm344, %v338, 0
        %v577 = vsel %vm344, %v339, 0
        %v580 = vsel %vm344, %v340, 0
        %v583 = vsel %vm344, %v341, 0
        %585 = vmatprep.subr.mxu0 0.0
        %586 = vmatpush1.msra.mxu0 %v342
        %587 = vmatprep.subr.mxu0 0.0
        %588 = vmatpush1.msra.mxu0 %v343
        %589 = vmatprep.subr.mxu0 0.0
        %590 = vmatpush1.msra.mxu0 0.0
        %591 = vmatprep.subr.mxu0 0.0
        %592 = vmatpush1.msra.mxu0 0.0
        %593 = vmatprep.subr.mxu0 0.0
        %594 = vmatpush1.msra.mxu0 0.0
        %595 = vmatprep.subr.mxu0 0.0
        %596 = vmatpush1.msra.mxu0 0.0
        %597 = vmatprep.subr.mxu0 0.0
        %598 = vmatpush1.msra.mxu0 0.0
        %599 = vmatprep.subr.mxu0 0.0
        %600 = vmatpush1.msra.mxu0 0.0
        %601 = vmatprep.subr.mxu0 0.0
        %602 = vmatpush1.msra.mxu0 0.0
        %603 = vmatprep.subr.mxu0 0.0
        %604 = vmatpush1.msra.mxu0 0.0
        %605 = vmatprep.subr.mxu0 0.0
        %606 = vmatpush1.msra.mxu0 0.0
        %607 = vmatprep.subr.mxu0 0.0
        %608 = vmatpush1.msra.mxu0 0.0
        %609 = vmatprep.subr.mxu0 0.0
        %610 = vmatpush1.msra.mxu0 0.0
        %611 = vmatprep.subr.mxu0 0.0
        %612 = vmatpush1.msra.mxu0 0.0
        %613 = vmatprep.subr.mxu0 0.0
        %614 = vmatpush1.msra.mxu0 0.0
        %615 = vmatprep.subr.mxu0 0.0
        %616 = vmatpush1.msra.mxu0 0.0
        %617 = vmatprep.subr.mxu0 0.0
        %618 = vmatpush1.msra.mxu0 0.0
        %619 = vmatprep.subr.mxu0 0.0
        %620 = vmatpush1.msra.mxu0 0.0
        %621 = vmatprep.subr.mxu0 0.0
        %622 = vmatpush1.msra.mxu0 0.0
        %623 = vmatprep.subr.mxu0 0.0
        %624 = vmatpush1.msra.mxu0 0.0
        %625 = vmatprep.subr.mxu0 0.0
        %626 = vmatpush1.msra.mxu0 0.0
        %627 = vmatprep.subr.mxu0 0.0
        %628 = vmatpush1.msra.mxu0 0.0
        %629 = vmatprep.subr.mxu0 0.0
        %630 = vmatpush1.msra.mxu0 0.0
        %631 = vmatprep.subr.mxu0 0.0
        %632 = vmatpush1.msra.mxu0 0.0
        %633 = vmatprep.subr.mxu0 0.0
        %634 = vmatpush1.msra.mxu0 0.0
        %635 = vmatprep.subr.mxu0 0.0
        %636 = vmatpush1.msra.mxu0 0.0
        %637 = vmatprep.subr.mxu0 0.0
        %638 = vmatpush1.msra.mxu0 0.0
        %639 = vmatprep.subr.mxu0 0.0
        %640 = vmatpush1.msra.mxu0 0.0
        %641 = vmatprep.subr.mxu0 0.0
        %642 = vmatpush1.msra.mxu0 0.0
        %643 = vmatprep.subr.mxu0 0.0
        %644 = vmatpush1.msra.mxu0 0.0
        %645 = vmatprep.subr.mxu0 0.0
        %646 = vmatpush1.msra.mxu0 0.0
        %647 = vmatprep.subr.mxu0 0.0
        %648 = vmatpush1.msra.mxu0 0.0
        %649 = vmatprep.mubr.f32.mxu0 0.0
        %650 = vmatmul.mubr.f32.gmra.mrb[0].mxu0 %v346
        %v651 = vpop.f32.mrb[0].mxu0
        %v652 = vadd.f32 0.0, %v651
        %v653 = vpop.f32.mrb[0].mxu0
        %654 = vmatprep.mubr.f32.mxu0 0.0
        %655 = vmatmul.mubr.f32.gmra.mrb[0].mxu0 %v349
        %v656 = vpop.f32.mrb[0].mxu0
        %v657 = vadd.f32 0.0, %v656
        %v658 = vpop.f32.mrb[0].mxu0
        %659 = vmatprep.mubr.f32.mxu0 0.0
        %660 = vmatmul.mubr.f32.gmra.mrb[0].mxu0 %v352
        %v661 = vpop.f32.mrb[0].mxu0
        %v662 = vadd.f32 0.0, %v661
        %v663 = vpop.f32.mrb[0].mxu0
        %664 = vmatprep.mubr.f32.mxu0 0.0
        %665 = vmatmul.mubr.f32.gmra.mrb[0].mxu0 %v355
        %v666 = vpop.f32.mrb[0].mxu0
        %v667 = vadd.f32 0.0, %v666
        %v668 = vpop.f32.mrb[0].mxu0
        %669 = vmatprep.mubr.f32.mxu0 0.0
        %670 = vmatmul.mubr.f32.gmra.mrb[0].mxu0 %v358
        %v671 = vpop.f32.mrb[0].mxu0
        %v672 = vadd.f32 0.0, %v671
        %v673 = vpop.f32.mrb[0].mxu0
        %674 = vmatprep.mubr.f32.mxu0 0.0
        %675 = vmatmul.mubr.f32.gmra.mrb[0].mxu0 %v361
        %v676 = vpop.f32.mrb[0].mxu0
        %v677 = vadd.f32 0.0, %v676
        %v678 = vpop.f32.mrb[0].mxu0
        %679 = vmatprep.mubr.f32.mxu0 0.0
        %680 = vmatmul.mubr.f32.gmra.mrb[0].mxu0 %v364
        %v681 = vpop.f32.mrb[0].mxu0
        %v682 = vadd.f32 0.0, %v681
        %v683 = vpop.f32.mrb[0].mxu0
        %684 = vmatprep.mubr.f32.mxu0 0.0
        %685 = vmatmul.mubr.f32.gmra.mrb[0].mxu0 %v367
        %v686 = vpop.f32.mrb[0].mxu0
        %v687 = vadd.f32 0.0, %v686
        %v688 = vpop.f32.mrb[0].mxu0
        %689 = vmatprep.mubr.f32.mxu0 0.0
        %690 = vmatmul.mubr.f32.gmra.mrb[0].mxu0 %v370
        %v691 = vpop.f32.mrb[0].mxu0
        %v692 = vadd.f32 0.0, %v691
        %v693 = vpop.f32.mrb[0].mxu0
        %694 = vmatprep.mubr.f32.mxu0 0.0
        %695 = vmatmul.mubr.f32.gmra.mrb[0].mxu0 %v373
        %v696 = vpop.f32.mrb[0].mxu0
        %v697 = vadd.f32 0.0, %v696
        %v698 = vpop.f32.mrb[0].mxu0
        %699 = vmatprep.mubr.f32.mxu0 0.0
        %700 = vmatmul.mubr.f32.gmra.mrb[0].mxu0 %v376
        %v701 = vpop.f32.mrb[0].mxu0
        %v702 = vadd.f32 0.0, %v701
        %v703 = vpop.f32.mrb[0].mxu0
        %704 = vmatprep.mubr.f32.mxu0 0.0
        %705 = vmatmul.mubr.f32.gmra.mrb[0].mxu0 %v379
        %v706 = vpop.f32.mrb[0].mxu0
        %v707 = vadd.f32 0.0, %v706
        %v708 = vpop.f32.mrb[0].mxu0
        %709 = vmatprep.mubr.f32.mxu0 0.0
        %710 = vmatmul.mubr.f32.gmra.mrb[0].mxu0 %v382
        %v711 = vpop.f32.mrb[0].mxu0
        %v712 = vadd.f32 0.0, %v711
        %v713 = vpop.f32.mrb[0].mxu0
        %714 = vmatprep.mubr.f32.mxu0 0.0
        %715 = vmatmul.mubr.f32.gmra.mrb[0].mxu0 %v385
        %v716 = vpop.f32.mrb[0].mxu0
        %v717 = vadd.f32 0.0, %v716
        %v718 = vpop.f32.mrb[0].mxu0
        %719 = vmatprep.mubr.f32.mxu0 0.0
        %720 = vmatmul.mubr.f32.gmra.mrb[0].mxu0 %v388
        %v721 = vpop.f32.mrb[0].mxu0
        %v722 = vadd.f32 0.0, %v721
        %v723 = vpop.f32.mrb[0].mxu0
        %724 = vmatprep.mubr.f32.mxu0 0.0
        %725 = vmatmul.mubr.f32.gmra.mrb[0].mxu0 %v391
        %v726 = vpop.f32.mrb[0].mxu0
        %v727 = vadd.f32 0.0, %v726
        %v728 = vpop.f32.mrb[0].mxu0
        %729 = vmatprep.mubr.f32.mxu0 0.0
        %730 = vmatmul.mubr.f32.gmra.mrb[0].mxu0 %v394
        %v731 = vpop.f32.mrb[0].mxu0
        %v732 = vadd.f32 0.0, %v731
        %v733 = vpop.f32.mrb[0].mxu0
        %734 = vmatprep.mubr.f32.mxu0 0.0
        %735 = vmatmul.mubr.f32.gmra.mrb[0].mxu0 %v397
        %v736 = vpop.f32.mrb[0].mxu0
        %v737 = vadd.f32 0.0, %v736
        %v738 = vpop.f32.mrb[0].mxu0
        %739 = vmatprep.mubr.f32.mxu0 0.0
        %740 = vmatmul.mubr.f32.gmra.mrb[0].mxu0 %v400
        %v741 = vpop.f32.mrb[0].mxu0
        %v742 = vadd.f32 0.0, %v741
        %v743 = vpop.f32.mrb[0].mxu0
        %744 = vmatprep.mubr.f32.mxu0 0.0
        %745 = vmatmul.mubr.f32.gmra.mrb[0].mxu0 %v403
        %v746 = vpop.f32.mrb[0].mxu0
        %v747 = vadd.f32 0.0, %v746
        %v748 = vpop.f32.mrb[0].mxu0
        %749 = vmatprep.mubr.f32.mxu0 0.0
        %750 = vmatmul.mubr.f32.gmra.mrb[0].mxu0 %v406
        %v751 = vpop.f32.mrb[0].mxu0
        %v752 = vadd.f32 0.0, %v751
        %v753 = vpop.f32.mrb[0].mxu0
        %754 = vmatprep.mubr.f32.mxu0 0.0
        %755 = vmatmul.mubr.f32.gmra.mrb[0].mxu0 %v409
        %v756 = vpop.f32.mrb[0].mxu0
        %v757 = vadd.f32 0.0, %v756
        %v758 = vpop.f32.mrb[0].mxu0
        %759 = vmatprep.mubr.f32.mxu0 0.0
        %760 = vmatmul.mubr.f32.gmra.mrb[0].mxu0 %v412
        %v761 = vpop.f32.mrb[0].mxu0
        %v762 = vadd.f32 0.0, %v761
        %v763 = vpop.f32.mrb[0].mxu0
        %764 = vmatprep.mubr.f32.mxu0 0.0
        %765 = vmatmul.mubr.f32.gmra.mrb[0].mxu0 %v415
        %v766 = vpop.f32.mrb[0].mxu0
        %v767 = vadd.f32 0.0, %v766
        %v768 = vpop.f32.mrb[0].mxu0
        %769 = vmatprep.mubr.f32.mxu0 0.0
        %770 = vmatmul.mubr.f32.gmra.mrb[0].mxu0 %v418
        %v771 = vpop.f32.mrb[0].mxu0
        %v772 = vadd.f32 0.0, %v771
        %v773 = vpop.f32.mrb[0].mxu0
        %774 = vmatprep.mubr.f32.mxu0 0.0
        %775 = vmatmul.mubr.f32.gmra.mrb[0].mxu0 %v421
        %v776 = vpop.f32.mrb[0].mxu0
        %v777 = vadd.f32 0.0, %v776
        %v778 = vpop.f32.mrb[0].mxu0
        %779 = vmatprep.mubr.f32.mxu0 0.0
        %780 = vmatmul.mubr.f32.gmra.mrb[0].mxu0 %v424
        %v781 = vpop.f32.mrb[0].mxu0
        %v782 = vadd.f32 0.0, %v781
        %v783 = vpop.f32.mrb[0].mxu0
        %784 = vmatprep.mubr.f32.mxu0 0.0
        %785 = vmatmul.mubr.f32.gmra.mrb[0].mxu0 %v427
        %v786 = vpop.f32.mrb[0].mxu0
        %v787 = vadd.f32 0.0, %v786
        %v788 = vpop.f32.mrb[0].mxu0
        %789 = vmatprep.mubr.f32.mxu0 0.0
        %790 = vmatmul.mubr.f32.gmra.mrb[0].mxu0 %v430
        %v791 = vpop.f32.mrb[0].mxu0
        %v792 = vadd.f32 0.0, %v791
        %v793 = vpop.f32.mrb[0].mxu0
        %794 = vmatprep.mubr.f32.mxu0 0.0
        %795 = vmatmul.mubr.f32.gmra.mrb[0].mxu0 %v433
        %v796 = vpop.f32.mrb[0].mxu0
        %v797 = vadd.f32 0.0, %v796
        %v798 = vpop.f32.mrb[0].mxu0
        %799 = vmatprep.mubr.f32.mxu0 0.0
        %800 = vmatmul.mubr.f32.gmra.mrb[0].mxu0 %v436
        %v801 = vpop.f32.mrb[0].mxu0
        %v802 = vadd.f32 0.0, %v801
        %v803 = vpop.f32.mrb[0].mxu0
        %804 = vmatprep.mubr.f32.mxu0 0.0
        %805 = vmatmul.mubr.f32.gmra.mrb[0].mxu0 %v439
        %v806 = vpop.f32.mrb[0].mxu0
        %v807 = vadd.f32 0.0, %v806
        %v808 = vpop.f32.mrb[0].mxu0
        %809 = vmatprep.mubr.f32.mxu0 0.0
        %810 = vmatmul.mubr.f32.gmra.mrb[0].mxu0 %v442
        %v811 = vpop.f32.mrb[0].mxu0
        %v812 = vadd.f32 0.0, %v811
        %v813 = vpop.f32.mrb[0].mxu0
        %814 = vmatprep.mubr.f32.mxu0 0.0
        %815 = vmatmul.mubr.f32.gmra.mrb[0].mxu0 %v445
        %v816 = vpop.f32.mrb[0].mxu0
        %v817 = vadd.f32 0.0, %v816
        %v818 = vpop.f32.mrb[0].mxu0
        %819 = vmatprep.mubr.f32.mxu0 0.0
        %820 = vmatmul.mubr.f32.gmra.mrb[0].mxu0 %v448
        %v821 = vpop.f32.mrb[0].mxu0
        %v822 = vadd.f32 0.0, %v821
        %v823 = vpop.f32.mrb[0].mxu0
        %824 = vmatprep.mubr.f32.mxu0 0.0
        %825 = vmatmul.mubr.f32.gmra.mrb[0].mxu0 %v451
        %v826 = vpop.f32.mrb[0].mxu0
        %v827 = vadd.f32 0.0, %v826
        %v828 = vpop.f32.mrb[0].mxu0
        %829 = vmatprep.mubr.f32.mxu0 0.0
        %830 = vmatmul.mubr.f32.gmra.mrb[0].mxu0 %v454
        %v831 = vpop.f32.mrb[0].mxu0
        %v832 = vadd.f32 0.0, %v831
        %v833 = vpop.f32.mrb[0].mxu0
        %834 = vmatprep.mubr.f32.mxu0 0.0
        %835 = vmatmul.mubr.f32.gmra.mrb[0].mxu0 %v457
        %v836 = vpop.f32.mrb[0].mxu0
        %v837 = vadd.f32 0.0, %v836
        %v838 = vpop.f32.mrb[0].mxu0
        %839 = vmatprep.mubr.f32.mxu0 0.0
        %840 = vmatmul.mubr.f32.gmra.mrb[0].mxu0 %v460
        %v841 = vpop.f32.mrb[0].mxu0
        %v842 = vadd.f32 0.0, %v841
        %v843 = vpop.f32.mrb[0].mxu0
        %844 = vmatprep.mubr.f32.mxu0 0.0
        %845 = vmatmul.mubr.f32.gmra.mrb[0].mxu0 %v463
        %v846 = vpop.f32.mrb[0].mxu0
        %v847 = vadd.f32 0.0, %v846
        %v848 = vpop.f32.mrb[0].mxu0
        %849 = vmatprep.mubr.f32.mxu0 0.0
        %850 = vmatmul.mubr.f32.gmra.mrb[0].mxu0 %v466
        %v851 = vpop.f32.mrb[0].mxu0
        %v852 = vadd.f32 0.0, %v851
        %v853 = vpop.f32.mrb[0].mxu0
        %854 = vmatprep.mubr.f32.mxu0 0.0
        %855 = vmatmul.mubr.f32.gmra.mrb[0].mxu0 %v469
        %v856 = vpop.f32.mrb[0].mxu0
        %v857 = vadd.f32 0.0, %v856
        %v858 = vpop.f32.mrb[0].mxu0
        %859 = vmatprep.mubr.f32.mxu0 0.0
        %860 = vmatmul.mubr.f32.gmra.mrb[0].mxu0 %v472
        %v861 = vpop.f32.mrb[0].mxu0
        %v862 = vadd.f32 0.0, %v861
        %v863 = vpop.f32.mrb[0].mxu0
        %864 = vmatprep.mubr.f32.mxu0 0.0
        %865 = vmatmul.mubr.f32.gmra.mrb[0].mxu0 %v475
        %v866 = vpop.f32.mrb[0].mxu0
        %v867 = vadd.f32 0.0, %v866
        %v868 = vpop.f32.mrb[0].mxu0
        %869 = vmatprep.mubr.f32.mxu0 0.0
        %870 = vmatmul.mubr.f32.gmra.mrb[0].mxu0 %v478
        %v871 = vpop.f32.mrb[0].mxu0
        %v872 = vadd.f32 0.0, %v871
        %v873 = vpop.f32.mrb[0].mxu0
        %874 = vmatprep.mubr.f32.mxu0 0.0
        %875 = vmatmul.mubr.f32.gmra.mrb[0].mxu0 %v481
        %v876 = vpop.f32.mrb[0].mxu0
        %v877 = vadd.f32 0.0, %v876
        %v878 = vpop.f32.mrb[0].mxu0
        %879 = vmatprep.mubr.f32.mxu0 0.0
        %880 = vmatmul.mubr.f32.gmra.mrb[0].mxu0 %v484
        %v881 = vpop.f32.mrb[0].mxu0
        %v882 = vadd.f32 0.0, %v881
        %v883 = vpop.f32.mrb[0].mxu0
        %884 = vmatprep.mubr.f32.mxu0 0.0
        %885 = vmatmul.mubr.f32.gmra.mrb[0].mxu0 %v487
        %v886 = vpop.f32.mrb[0].mxu0
        %v887 = vadd.f32 0.0, %v886
        %v888 = vpop.f32.mrb[0].mxu0
        %889 = vmatprep.mubr.f32.mxu0 0.0
        %890 = vmatmul.mubr.f32.gmra.mrb[0].mxu0 %v490
        %v891 = vpop.f32.mrb[0].mxu0
        %v892 = vadd.f32 0.0, %v891
        %v893 = vpop.f32.mrb[0].mxu0
        %894 = vmatprep.mubr.f32.mxu0 0.0
        %895 = vmatmul.mubr.f32.gmra.mrb[0].mxu0 %v493
        %v896 = vpop.f32.mrb[0].mxu0
        %v897 = vadd.f32 0.0, %v896
        %v898 = vpop.f32.mrb[0].mxu0
        %899 = vmatprep.mubr.f32.mxu0 0.0
        %900 = vmatmul.mubr.f32.gmra.mrb[0].mxu0 %v496
        %v901 = vpop.f32.mrb[0].mxu0
        %v902 = vadd.f32 0.0, %v901
        %v903 = vpop.f32.mrb[0].mxu0
        %904 = vmatprep.mubr.f32.mxu0 0.0
        %905 = vmatmul.mubr.f32.gmra.mrb[0].mxu0 %v499
        %v906 = vpop.f32.mrb[0].mxu0
        %v907 = vadd.f32 0.0, %v906
        %v908 = vpop.f32.mrb[0].mxu0
        %909 = vmatprep.mubr.f32.mxu0 0.0
        %910 = vmatmul.mubr.f32.gmra.mrb[0].mxu0 %v502
        %v911 = vpop.f32.mrb[0].mxu0
        %v912 = vadd.f32 0.0, %v911
        %v913 = vpop.f32.mrb[0].mxu0
        %914 = vmatprep.mubr.f32.mxu0 0.0
        %915 = vmatmul.mubr.f32.gmra.mrb[0].mxu0 %v505
        %v916 = vpop.f32.mrb[0].mxu0
        %v917 = vadd.f32 0.0, %v916
        %v918 = vpop.f32.mrb[0].mxu0
        %919 = vmatprep.mubr.f32.mxu0 0.0
        %920 = vmatmul.mubr.f32.gmra.mrb[0].mxu0 %v508
        %v921 = vpop.f32.mrb[0].mxu0
        %v922 = vadd.f32 0.0, %v921
        %v923 = vpop.f32.mrb[0].mxu0
        %924 = vmatprep.mubr.f32.mxu0 0.0
        %925 = vmatmul.mubr.f32.gmra.mrb[0].mxu0 %v511
        %v926 = vpop.f32.mrb[0].mxu0
        %v927 = vadd.f32 0.0, %v926
        %v928 = vpop.f32.mrb[0].mxu0
        %929 = vmatprep.mubr.f32.mxu0 0.0
        %930 = vmatmul.mubr.f32.gmra.mrb[0].mxu0 %v514
        %v931 = vpop.f32.mrb[0].mxu0
        %v932 = vadd.f32 0.0, %v931
        %v933 = vpop.f32.mrb[0].mxu0
        %934 = vmatprep.mubr.f32.mxu0 0.0
        %935 = vmatmul.mubr.f32.gmra.mrb[0].mxu0 %v517
        %v936 = vpop.f32.mrb[0].mxu0
        %v937 = vadd.f32 0.0, %v936
        %v938 = vpop.f32.mrb[0].mxu0
        %939 = vmatprep.mubr.f32.mxu0 0.0
        %940 = vmatmul.mubr.f32.gmra.mrb[0].mxu0 %v520
        %v941 = vpop.f32.mrb[0].mxu0
        %v942 = vadd.f32 0.0, %v941
        %v943 = vpop.f32.mrb[0].mxu0
        %944 = vmatprep.mubr.f32.mxu0 0.0
        %945 = vmatmul.mubr.f32.gmra.mrb[0].mxu0 %v523
        %v946 = vpop.f32.mrb[0].mxu0
        %v947 = vadd.f32 0.0, %v946
        %v948 = vpop.f32.mrb[0].mxu0
        %949 = vmatprep.mubr.f32.mxu0 0.0
        %950 = vmatmul.mubr.f32.gmra.mrb[0].mxu0 %v526
        %v951 = vpop.f32.mrb[0].mxu0
        %v952 = vadd.f32 0.0, %v951
        %v953 = vpop.f32.mrb[0].mxu0
        %954 = vmatprep.mubr.f32.mxu0 0.0
        %955 = vmatmul.mubr.f32.gmra.mrb[0].mxu0 %v529
        %v956 = vpop.f32.mrb[0].mxu0
        %v957 = vadd.f32 0.0, %v956
        %v958 = vpop.f32.mrb[0].mxu0
        %959 = vmatprep.mubr.f32.mxu0 0.0
        %960 = vmatmul.mubr.f32.gmra.mrb[0].mxu0 %v532
        %v961 = vpop.f32.mrb[0].mxu0
        %v962 = vadd.f32 0.0, %v961
        %v963 = vpop.f32.mrb[0].mxu0
        %964 = vmatprep.mubr.f32.mxu0 0.0
        %965 = vmatmul.mubr.f32.gmra.mrb[0].mxu0 %v535
        %v966 = vpop.f32.mrb[0].mxu0
        %v967 = vadd.f32 0.0, %v966
        %v968 = vpop.f32.mrb[0].mxu0
        %969 = vmatprep.mubr.f32.mxu0 0.0
        %970 = vmatmul.mubr.f32.gmra.mrb[0].mxu0 %v538
        %v971 = vpop.f32.mrb[0].mxu0
        %v972 = vadd.f32 0.0, %v971
        %v973 = vpop.f32.mrb[0].mxu0
        %974 = vmatprep.mubr.f32.mxu0 0.0
        %975 = vmatmul.mubr.f32.gmra.mrb[0].mxu0 %v541
        %v976 = vpop.f32.mrb[0].mxu0
        %v977 = vadd.f32 0.0, %v976
        %v978 = vpop.f32.mrb[0].mxu0
        %979 = vmatprep.mubr.f32.mxu0 0.0
        %980 = vmatmul.mubr.f32.gmra.mrb[0].mxu0 %v544
        %v981 = vpop.f32.mrb[0].mxu0
        %v982 = vadd.f32 0.0, %v981
        %v983 = vpop.f32.mrb[0].mxu0
        %984 = vmatprep.mubr.f32.mxu0 0.0
        %985 = vmatmul.mubr.f32.gmra.mrb[0].mxu0 %v547
        %v986 = vpop.f32.mrb[0].mxu0
        %v987 = vadd.f32 0.0, %v986
        %v988 = vpop.f32.mrb[0].mxu0
        %989 = vmatprep.mubr.f32.mxu0 0.0
        %990 = vmatmul.mubr.f32.gmra.mrb[0].mxu0 %v550
        %v991 = vpop.f32.mrb[0].mxu0
        %v992 = vadd.f32 0.0, %v991
        %v993 = vpop.f32.mrb[0].mxu0
        %994 = vmatprep.mubr.f32.mxu0 0.0
        %995 = vmatmul.mubr.f32.gmra.mrb[0].mxu0 %v553
        %v996 = vpop.f32.mrb[0].mxu0
        %v997 = vadd.f32 0.0, %v996
        %v998 = vpop.f32.mrb[0].mxu0
        %999 = vmatprep.mubr.f32.mxu0 0.0
        %1000 = vmatmul.mubr.f32.gmra.mrb[0].mxu0 %v556
        %v1001 = vpop.f32.mrb[0].mxu0
        %v1002 = vadd.f32 0.0, %v1001
        %v1003 = vpop.f32.mrb[0].mxu0
        %1004 = vmatprep.mubr.f32.mxu0 0.0
        %1005 = vmatmul.mubr.f32.gmra.mrb[0].mxu0 %v559
        %v1006 = vpop.f32.mrb[0].mxu0
        %v1007 = vadd.f32 0.0, %v1006
        %v1008 = vpop.f32.mrb[0].mxu0
        %1009 = vmatprep.mubr.f32.mxu0 0.0
        %1010 = vmatmul.mubr.f32.gmra.mrb[0].mxu0 %v562
        %v1011 = vpop.f32.mrb[0].mxu0
        %v1012 = vadd.f32 0.0, %v1011
        %v1013 = vpop.f32.mrb[0].mxu0
        %1014 = vmatprep.mubr.f32.mxu0 0.0
        %1015 = vmatmul.mubr.f32.gmra.mrb[0].mxu0 %v565
        %v1016 = vpop.f32.mrb[0].mxu0
        %v1017 = vadd.f32 0.0, %v1016
        %v1018 = vpop.f32.mrb[0].mxu0
        %1019 = vmatprep.mubr.f32.mxu0 0.0
        %1020 = vmatmul.mubr.f32.gmra.mrb[0].mxu0 %v568
        %v1021 = vpop.f32.mrb[0].mxu0
        %v1022 = vadd.f32 0.0, %v1021
        %v1023 = vpop.f32.mrb[0].mxu0
        %1024 = vmatprep.mubr.f32.mxu0 0.0
        %1025 = vmatmul.mubr.f32.gmra.mrb[0].mxu0 %v571
        %v1026 = vpop.f32.mrb[0].mxu0
        %v1027 = vadd.f32 0.0, %v1026
        %v1028 = vpop.f32.mrb[0].mxu0
        %1029 = vmatprep.mubr.f32.mxu0 0.0
        %1030 = vmatmul.mubr.f32.gmra.mrb[0].mxu0 %v574
        %v1031 = vpop.f32.mrb[0].mxu0
        %v1032 = vadd.f32 0.0, %v1031
        %v1033 = vpop.f32.mrb[0].mxu0
        %1034 = vmatprep.mubr.f32.mxu0 0.0
        %1035 = vmatmul.mubr.f32.gmra.mrb[0].mxu0 %v577
        %v1036 = vpop.f32.mrb[0].mxu0
        %v1037 = vadd.f32 0.0, %v1036
        %v1038 = vpop.f32.mrb[0].mxu0
        %1039 = vmatprep.mubr.f32.mxu0 0.0
        %1040 = vmatmul.mubr.f32.gmra.mrb[0].mxu0 %v580
        %v1041 = vpop.f32.mrb[0].mxu0
        %v1042 = vadd.f32 0.0, %v1041
        %v1043 = vpop.f32.mrb[0].mxu0
        %1044 = vmatprep.mubr.f32.mxu0 0.0
        %1045 = vmatmul.mubr.f32.gmra.mrb[0].mxu0 %v583
        %v1046 = vpop.f32.mrb[0].mxu0
        %v1047 = vadd.f32 0.0, %v1046
        %v1048 = vpop.f32.mrb[0].mxu0
        %1049 = vdwg.mxu0
        %v1050 = vmul.f32 %v652, 0.0010283801
        %v1051 = vmul.f32 %v657, 0.0010283801
        %v1052 = vmul.f32 %v672, 0.0010283801
        %v1053 = vmul.f32 %v677, 0.0010283801
        %v1054 = vmul.f32 %v692, 0.0010283801
        %v1055 = vmul.f32 %v697, 0.0010283801
        %v1056 = vmul.f32 %v712, 0.0010283801
        %v1057 = vmul.f32 %v717, 0.0010283801
        %v1058 = vmul.f32 %v732, 0.0010283801
        %v1059 = vmul.f32 %v737, 0.0010283801
        %v1060 = vmul.f32 %v752, 0.0010283801
        %v1061 = vmul.f32 %v757, 0.0010283801
        %v1062 = vmul.f32 %v772, 0.0010283801
        %v1063 = vmul.f32 %v777, 0.0010283801
        %v1064 = vmul.f32 %v792, 0.0010283801
        %v1065 = vmul.f32 %v797, 0.0010283801
        %v1066 = vmul.f32 %v812, 0.0010283801
        %v1067 = vmul.f32 %v817, 0.0010283801
        %v1068 = vmul.f32 %v832, 0.0010283801
        %v1069 = vmul.f32 %v837, 0.0010283801
        %v1070 = vmul.f32 %v852, 0.0010283801
        %v1071 = vmul.f32 %v857, 0.0010283801
        %v1072 = vmul.f32 %v872, 0.0010283801
        %v1073 = vmul.f32 %v877, 0.0010283801
        %v1074 = vmul.f32 %v892, 0.0010283801
        %v1075 = vmul.f32 %v897, 0.0010283801
        %v1076 = vmul.f32 %v912, 0.0010283801
        %v1077 = vmul.f32 %v917, 0.0010283801
        %v1078 = vmul.f32 %v932, 0.0010283801
        %v1079 = vmul.f32 %v937, 0.0010283801
        %v1080 = vmul.f32 %v952, 0.0010283801
        %v1081 = vmul.f32 %v957, 0.0010283801
        %v1082 = vmul.f32 %v972, 0.0010283801
        %v1083 = vmul.f32 %v977, 0.0010283801
        %v1084 = vmul.f32 %v992, 0.0010283801
        %v1085 = vmul.f32 %v997, 0.0010283801
        %v1086 = vmul.f32 %v1012, 0.0010283801
        %v1087 = vmul.f32 %v1017, 0.0010283801
        %v1088 = vmul.f32 %v1032, 0.0010283801
        %v1089 = vmul.f32 %v1037, 0.0010283801
        %v1090 = vmul.f32 %v652, 0.007598758
        %v1091 = vmul.f32 %v657, 0.007598758
        %v1092 = vmul.f32 %v662, 0.007598758
        %v1093 = vmul.f32 %v672, 0.007598758
        %v1094 = vmul.f32 %v677, 0.007598758
        %v1095 = vmul.f32 %v682, 0.007598758
        %v1096 = vmul.f32 %v692, 0.007598758
        %v1097 = vmul.f32 %v697, 0.007598758
        %v1098 = vmul.f32 %v702, 0.007598758
        %v1099 = vmul.f32 %v712, 0.007598758
        %v1100 = vmul.f32 %v717, 0.007598758
        %v1101 = vmul.f32 %v722, 0.007598758
        %v1102 = vmul.f32 %v732, 0.007598758
        %v1103 = vmul.f32 %v737, 0.007598758
        %v1104 = vmul.f32 %v742, 0.007598758
        %v1105 = vmul.f32 %v752, 0.007598758
        %v1106 = vmul.f32 %v757, 0.007598758
        %v1107 = vmul.f32 %v762, 0.007598758
        %v1108 = vmul.f32 %v772, 0.007598758
        %v1109 = vmul.f32 %v777, 0.007598758
        %v1110 = vmul.f32 %v782, 0.007598758
        %v1111 = vmul.f32 %v792, 0.007598758
        %v1112 = vmul.f32 %v797, 0.007598758
        %v1113 = vmul.f32 %v802, 0.007598758
        %v1114 = vmul.f32 %v812, 0.007598758
        %v1115 = vmul.f32 %v817, 0.007598758
        %v1116 = vmul.f32 %v822, 0.007598758
        %v1117 = vmul.f32 %v832, 0.007598758
        %v1118 = vmul.f32 %v837, 0.007598758
        %v1119 = vmul.f32 %v842, 0.007598758
        %v1120 = vmul.f32 %v852, 0.007598758
        %v1121 = vmul.f32 %v857, 0.007598758
        %v1122 = vmul.f32 %v862, 0.007598758
        %v1123 = vmul.f32 %v872, 0.007598758
        %v1124 = vmul.f32 %v877, 0.007598758
        %v1125 = vmul.f32 %v882, 0.007598758
        %v1126 = vmul.f32 %v892, 0.007598758
        %v1127 = vmul.f32 %v897, 0.007598758
        %v1128 = vmul.f32 %v902, 0.007598758
        %v1129 = vmul.f32 %v912, 0.007598758
        %v1130 = vmul.f32 %v917, 0.007598758
        %v1131 = vmul.f32 %v922, 0.007598758
        %v1132 = vmul.f32 %v932, 0.007598758
        %v1133 = vmul.f32 %v937, 0.007598758
        %v1134 = vmul.f32 %v942, 0.007598758
        %v1135 = vmul.f32 %v952, 0.007598758
        %v1136 = vmul.f32 %v957, 0.007598758
        %v1137 = vmul.f32 %v962, 0.007598758
        %v1138 = vmul.f32 %v972, 0.007598758
        %v1139 = vmul.f32 %v977, 0.007598758
        %v1140 = vmul.f32 %v982, 0.007598758
        %v1141 = vmul.f32 %v992, 0.007598758
        %v1142 = vmul.f32 %v997, 0.007598758
        %v1143 = vmul.f32 %v1002, 0.007598758
        %v1144 = vmul.f32 %v1012, 0.007598758
        %v1145 = vmul.f32 %v1017, 0.007598758
        %v1146 = vmul.f32 %v1022, 0.007598758
        %v1147 = vmul.f32 %v1032, 0.007598758
        %v1148 = vmul.f32 %v1037, 0.007598758
        %v1149 = vmul.f32 %v1042, 0.007598758
        %vm1210 = vcmask 1046528
        %v1211 = vrot.slane %v1090, 1
        %v1212 = vrot.slane %v1091, 1
        %v1213 = vsel %vm1210, %v1211, %v1212
        %v1214 = vrot.slane %v1092, 1
        %v1215 = vsel %vm1210, %v1212, %v1214
        %v1216 = vrot.slane %v1093, 1
        %v1217 = vrot.slane %v1094, 1
        %v1218 = vsel %vm1210, %v1216, %v1217
        %v1219 = vrot.slane %v1095, 1
        %v1220 = vsel %vm1210, %v1217, %v1219
        %v1221 = vrot.slane %v1096, 1
        %v1222 = vrot.slane %v1097, 1
        %v1223 = vsel %vm1210, %v1221, %v1222
        %v1224 = vrot.slane %v1098, 1
        %v1225 = vsel %vm1210, %v1222, %v1224
        %v1226 = vrot.slane %v1099, 1
        %v1227 = vrot.slane %v1100, 1
        %v1228 = vsel %vm1210, %v1226, %v1227
        %v1229 = vrot.slane %v1101, 1
        %v1230 = vsel %vm1210, %v1227, %v1229
        %v1231 = vrot.slane %v1102, 1
        %v1232 = vrot.slane %v1103, 1
        %v1233 = vsel %vm1210, %v1231, %v1232
        %v1234 = vrot.slane %v1104, 1
        %v1235 = vsel %vm1210, %v1232, %v1234
        %v1236 = vrot.slane %v1105, 1
        %v1237 = vrot.slane %v1106, 1
        %v1238 = vsel %vm1210, %v1236, %v1237
        %v1239 = vrot.slane %v1107, 1
        %v1240 = vsel %vm1210, %v1237, %v1239
        %v1241 = vrot.slane %v1108, 1
        %v1242 = vrot.slane %v1109, 1
        %v1243 = vsel %vm1210, %v1241, %v1242
        %v1244 = vrot.slane %v1110, 1
        %v1245 = vsel %vm1210, %v1242, %v1244
        %v1246 = vrot.slane %v1111, 1
        %v1247 = vrot.slane %v1112, 1
        %v1248 = vsel %vm1210, %v1246, %v1247
        %v1249 = vrot.slane %v1113, 1
        %v1250 = vsel %vm1210, %v1247, %v1249
        %v1251 = vrot.slane %v1114, 1
        %v1252 = vrot.slane %v1115, 1
        %v1253 = vsel %vm1210, %v1251, %v1252
        %v1254 = vrot.slane %v1116, 1
        %v1255 = vsel %vm1210, %v1252, %v1254
        %v1256 = vrot.slane %v1117, 1
        %v1257 = vrot.slane %v1118, 1
        %v1258 = vsel %vm1210, %v1256, %v1257
        %v1259 = vrot.slane %v1119, 1
        %v1260 = vsel %vm1210, %v1257, %v1259
        %v1261 = vrot.slane %v1120, 1
        %v1262 = vrot.slane %v1121, 1
        %v1263 = vsel %vm1210, %v1261, %v1262
        %v1264 = vrot.slane %v1122, 1
        %v1265 = vsel %vm1210, %v1262, %v1264
        %v1266 = vrot.slane %v1123, 1
        %v1267 = vrot.slane %v1124, 1
        %v1268 = vsel %vm1210, %v1266, %v1267
        %v1269 = vrot.slane %v1125, 1
        %v1270 = vsel %vm1210, %v1267, %v1269
        %v1271 = vrot.slane %v1126, 1
        %v1272 = vrot.slane %v1127, 1
        %v1273 = vsel %vm1210, %v1271, %v1272
        %v1274 = vrot.slane %v1128, 1
        %v1275 = vsel %vm1210, %v1272, %v1274
        %v1276 = vrot.slane %v1129, 1
        %v1277 = vrot.slane %v1130, 1
        %v1278 = vsel %vm1210, %v1276, %v1277
        %v1279 = vrot.slane %v1131, 1
        %v1280 = vsel %vm1210, %v1277, %v1279
        %v1281 = vrot.slane %v1132, 1
        %v1282 = vrot.slane %v1133, 1
        %v1283 = vsel %vm1210, %v1281, %v1282
        %v1284 = vrot.slane %v1134, 1
        %v1285 = vsel %vm1210, %v1282, %v1284
        %v1286 = vrot.slane %v1135, 1
        %v1287 = vrot.slane %v1136, 1
        %v1288 = vsel %vm1210, %v1286, %v1287
        %v1289 = vrot.slane %v1137, 1
        %v1290 = vsel %vm1210, %v1287, %v1289
        %v1291 = vrot.slane %v1138, 1
        %v1292 = vrot.slane %v1139, 1
        %v1293 = vsel %vm1210, %v1291, %v1292
        %v1294 = vrot.slane %v1140, 1
        %v1295 = vsel %vm1210, %v1292, %v1294
        %v1296 = vrot.slane %v1141, 1
        %v1297 = vrot.slane %v1142, 1
        %v1298 = vsel %vm1210, %v1296, %v1297
        %v1299 = vrot.slane %v1143, 1
        %v1300 = vsel %vm1210, %v1297, %v1299
        %v1301 = vrot.slane %v1144, 1
        %v1302 = vrot.slane %v1145, 1
        %v1303 = vsel %vm1210, %v1301, %v1302
        %v1304 = vrot.slane %v1146, 1
        %v1305 = vsel %vm1210, %v1302, %v1304
        %v1306 = vrot.slane %v1147, 1
        %v1307 = vrot.slane %v1148, 1
        %v1308 = vsel %vm1210, %v1306, %v1307
        %v1309 = vrot.slane %v1149, 1
        %v1310 = vsel %vm1210, %v1307, %v1309
        %v1351 = vadd.f32 %v1050, %v1213
        %v1352 = vadd.f32 %v1051, %v1215
        %v1353 = vadd.f32 %v1052, %v1218
        %v1354 = vadd.f32 %v1053, %v1220
        %v1355 = vadd.f32 %v1054, %v1223
        %v1356 = vadd.f32 %v1055, %v1225
        %v1357 = vadd.f32 %v1056, %v1228
        %v1358 = vadd.f32 %v1057, %v1230
        %v1359 = vadd.f32 %v1058, %v1233
        %v1360 = vadd.f32 %v1059, %v1235
        %v1361 = vadd.f32 %v1060, %v1238
        %v1362 = vadd.f32 %v1061, %v1240
        %v1363 = vadd.f32 %v1062, %v1243
        %v1364 = vadd.f32 %v1063, %v1245
        %v1365 = vadd.f32 %v1064, %v1248
        %v1366 = vadd.f32 %v1065, %v1250
        %v1367 = vadd.f32 %v1066, %v1253
        %v1368 = vadd.f32 %v1067, %v1255
        %v1369 = vadd.f32 %v1068, %v1258
        %v1370 = vadd.f32 %v1069, %v1260
        %v1371 = vadd.f32 %v1070, %v1263
        %v1372 = vadd.f32 %v1071, %v1265
        %v1373 = vadd.f32 %v1072, %v1268
        %v1374 = vadd.f32 %v1073, %v1270
        %v1375 = vadd.f32 %v1074, %v1273
        %v1376 = vadd.f32 %v1075, %v1275
        %v1377 = vadd.f32 %v1076, %v1278
        %v1378 = vadd.f32 %v1077, %v1280
        %v1379 = vadd.f32 %v1078, %v1283
        %v1380 = vadd.f32 %v1079, %v1285
        %v1381 = vadd.f32 %v1080, %v1288
        %v1382 = vadd.f32 %v1081, %v1290
        %v1383 = vadd.f32 %v1082, %v1293
        %v1384 = vadd.f32 %v1083, %v1295
        %v1385 = vadd.f32 %v1084, %v1298
        %v1386 = vadd.f32 %v1085, %v1300
        %v1387 = vadd.f32 %v1086, %v1303
        %v1388 = vadd.f32 %v1087, %v1305
        %v1389 = vadd.f32 %v1088, %v1308
        %v1390 = vadd.f32 %v1089, %v1310
        %v1391 = vmul.f32 %v652, 0.036000773
        %v1392 = vmul.f32 %v657, 0.036000773
        %v1393 = vmul.f32 %v662, 0.036000773
        %v1394 = vmul.f32 %v672, 0.036000773
        %v1395 = vmul.f32 %v677, 0.036000773
        %v1396 = vmul.f32 %v682, 0.036000773
        %v1397 = vmul.f32 %v692, 0.036000773
        %v1398 = vmul.f32 %v697, 0.036000773
        %v1399 = vmul.f32 %v702, 0.036000773
        %v1400 = vmul.f32 %v712, 0.036000773
        %v1401 = vmul.f32 %v717, 0.036000773
        %v1402 = vmul.f32 %v722, 0.036000773
        %v1403 = vmul.f32 %v732, 0.036000773
        %v1404 = vmul.f32 %v737, 0.036000773
        %v1405 = vmul.f32 %v742, 0.036000773
        %v1406 = vmul.f32 %v752, 0.036000773
        %v1407 = vmul.f32 %v757, 0.036000773
        %v1408 = vmul.f32 %v762, 0.036000773
        %v1409 = vmul.f32 %v772, 0.036000773
        %v1410 = vmul.f32 %v777, 0.036000773
        %v1411 = vmul.f32 %v782, 0.036000773
        %v1412 = vmul.f32 %v792, 0.036000773
        %v1413 = vmul.f32 %v797, 0.036000773
        %v1414 = vmul.f32 %v802, 0.036000773
        %v1415 = vmul.f32 %v812, 0.036000773
        %v1416 = vmul.f32 %v817, 0.036000773
        %v1417 = vmul.f32 %v822, 0.036000773
        %v1418 = vmul.f32 %v832, 0.036000773
        %v1419 = vmul.f32 %v837, 0.036000773
        %v1420 = vmul.f32 %v842, 0.036000773
        %v1421 = vmul.f32 %v852, 0.036000773
        %v1422 = vmul.f32 %v857, 0.036000773
        %v1423 = vmul.f32 %v862, 0.036000773
        %v1424 = vmul.f32 %v872, 0.036000773
        %v1425 = vmul.f32 %v877, 0.036000773
        %v1426 = vmul.f32 %v882, 0.036000773
        %v1427 = vmul.f32 %v892, 0.036000773
        %v1428 = vmul.f32 %v897, 0.036000773
        %v1429 = vmul.f32 %v902, 0.036000773
        %v1430 = vmul.f32 %v912, 0.036000773
        %v1431 = vmul.f32 %v917, 0.036000773
        %v1432 = vmul.f32 %v922, 0.036000773
        %v1433 = vmul.f32 %v932, 0.036000773
        %v1434 = vmul.f32 %v937, 0.036000773
        %v1435 = vmul.f32 %v942, 0.036000773
        %v1436 = vmul.f32 %v952, 0.036000773
        %v1437 = vmul.f32 %v957, 0.036000773
        %v1438 = vmul.f32 %v962, 0.036000773
        %v1439 = vmul.f32 %v972, 0.036000773
        %v1440 = vmul.f32 %v977, 0.036000773
        %v1441 = vmul.f32 %v982, 0.036000773
        %v1442 = vmul.f32 %v992, 0.036000773
        %v1443 = vmul.f32 %v997, 0.036000773
        %v1444 = vmul.f32 %v1002, 0.036000773
        %v1445 = vmul.f32 %v1012, 0.036000773
        %v1446 = vmul.f32 %v1017, 0.036000773
        %v1447 = vmul.f32 %v1022, 0.036000773
        %v1448 = vmul.f32 %v1032, 0.036000773
        %v1449 = vmul.f32 %v1037, 0.036000773
        %v1450 = vmul.f32 %v1042, 0.036000773
        %vm1511 = vcmask 1045504
        %v1512 = vrot.slane %v1391, 2
        %v1513 = vrot.slane %v1392, 2
        %v1514 = vsel %vm1511, %v1512, %v1513
        %v1515 = vrot.slane %v1393, 2
        %v1516 = vsel %vm1511, %v1513, %v1515
        %v1517 = vrot.slane %v1394, 2
        %v1518 = vrot.slane %v1395, 2
        %v1519 = vsel %vm1511, %v1517, %v1518
        %v1520 = vrot.slane %v1396, 2
        %v1521 = vsel %vm1511, %v1518, %v1520
        %v1522 = vrot.slane %v1397, 2
        %v1523 = vrot.slane %v1398, 2
        %v1524 = vsel %vm1511, %v1522, %v1523
        %v1525 = vrot.slane %v1399, 2
        %v1526 = vsel %vm1511, %v1523, %v1525
        %v1527 = vrot.slane %v1400, 2
        %v1528 = vrot.slane %v1401, 2
        %v1529 = vsel %vm1511, %v1527, %v1528
        %v1530 = vrot.slane %v1402, 2
        %v1531 = vsel %vm1511, %v1528, %v1530
        %v1532 = vrot.slane %v1403, 2
        %v1533 = vrot.slane %v1404, 2
        %v1534 = vsel %vm1511, %v1532, %v1533
        %v1535 = vrot.slane %v1405, 2
        %v1536 = vsel %vm1511, %v1533, %v1535
        %v1537 = vrot.slane %v1406, 2
        %v1538 = vrot.slane %v1407, 2
        %v1539 = vsel %vm1511, %v1537, %v1538
        %v1540 = vrot.slane %v1408, 2
        %v1541 = vsel %vm1511, %v1538, %v1540
        %v1542 = vrot.slane %v1409, 2
        %v1543 = vrot.slane %v1410, 2
        %v1544 = vsel %vm1511, %v1542, %v1543
        %v1545 = vrot.slane %v1411, 2
        %v1546 = vsel %vm1511, %v1543, %v1545
        %v1547 = vrot.slane %v1412, 2
        %v1548 = vrot.slane %v1413, 2
        %v1549 = vsel %vm1511, %v1547, %v1548
        %v1550 = vrot.slane %v1414, 2
        %v1551 = vsel %vm1511, %v1548, %v1550
        %v1552 = vrot.slane %v1415, 2
        %v1553 = vrot.slane %v1416, 2
        %v1554 = vsel %vm1511, %v1552, %v1553
        %v1555 = vrot.slane %v1417, 2
        %v1556 = vsel %vm1511, %v1553, %v1555
        %v1557 = vrot.slane %v1418, 2
        %v1558 = vrot.slane %v1419, 2
        %v1559 = vsel %vm1511, %v1557, %v1558
        %v1560 = vrot.slane %v1420, 2
        %v1561 = vsel %vm1511, %v1558, %v1560
        %v1562 = vrot.slane %v1421, 2
        %v1563 = vrot.slane %v1422, 2
        %v1564 = vsel %vm1511, %v1562, %v1563
        %v1565 = vrot.slane %v1423, 2
        %v1566 = vsel %vm1511, %v1563, %v1565
        %v1567 = vrot.slane %v1424, 2
        %v1568 = vrot.slane %v1425, 2
        %v1569 = vsel %vm1511, %v1567, %v1568
        %v1570 = vrot.slane %v1426, 2
        %v1571 = vsel %vm1511, %v1568, %v1570
        %v1572 = vrot.slane %v1427, 2
        %v1573 = vrot.slane %v1428, 2
        %v1574 = vsel %vm1511, %v1572, %v1573
        %v1575 = vrot.slane %v1429, 2
        %v1576 = vsel %vm1511, %v1573, %v1575
        %v1577 = vrot.slane %v1430, 2
        %v1578 = vrot.slane %v1431, 2
        %v1579 = vsel %vm1511, %v1577, %v1578
        %v1580 = vrot.slane %v1432, 2
        %v1581 = vsel %vm1511, %v1578, %v1580
        %v1582 = vrot.slane %v1433, 2
        %v1583 = vrot.slane %v1434, 2
        %v1584 = vsel %vm1511, %v1582, %v1583
        %v1585 = vrot.slane %v1435, 2
        %v1586 = vsel %vm1511, %v1583, %v1585
        %v1587 = vrot.slane %v1436, 2
        %v1588 = vrot.slane %v1437, 2
        %v1589 = vsel %vm1511, %v1587, %v1588
        %v1590 = vrot.slane %v1438, 2
        %v1591 = vsel %vm1511, %v1588, %v1590
        %v1592 = vrot.slane %v1439, 2
        %v1593 = vrot.slane %v1440, 2
        %v1594 = vsel %vm1511, %v1592, %v1593
        %v1595 = vrot.slane %v1441, 2
        %v1596 = vsel %vm1511, %v1593, %v1595
        %v1597 = vrot.slane %v1442, 2
        %v1598 = vrot.slane %v1443, 2
        %v1599 = vsel %vm1511, %v1597, %v1598
        %v1600 = vrot.slane %v1444, 2
        %v1601 = vsel %vm1511, %v1598, %v1600
        %v1602 = vrot.slane %v1445, 2
        %v1603 = vrot.slane %v1446, 2
        %v1604 = vsel %vm1511, %v1602, %v1603
        %v1605 = vrot.slane %v1447, 2
        %v1606 = vsel %vm1511, %v1603, %v1605
        %v1607 = vrot.slane %v1448, 2
        %v1608 = vrot.slane %v1449, 2
        %v1609 = vsel %vm1511, %v1607, %v1608
        %v1610 = vrot.slane %v1450, 2
        %v1611 = vsel %vm1511, %v1608, %v1610
        %v1652 = vadd.f32 %v1351, %v1514
        %v1653 = vadd.f32 %v1352, %v1516
        %v1654 = vadd.f32 %v1353, %v1519
        %v1655 = vadd.f32 %v1354, %v1521
        %v1656 = vadd.f32 %v1355, %v1524
        %v1657 = vadd.f32 %v1356, %v1526
        %v1658 = vadd.f32 %v1357, %v1529
        %v1659 = vadd.f32 %v1358, %v1531
        %v1660 = vadd.f32 %v1359, %v1534
        %v1661 = vadd.f32 %v1360, %v1536
        %v1662 = vadd.f32 %v1361, %v1539
        %v1663 = vadd.f32 %v1362, %v1541
        %v1664 = vadd.f32 %v1363, %v1544
        %v1665 = vadd.f32 %v1364, %v1546
        %v1666 = vadd.f32 %v1365, %v1549
        %v1667 = vadd.f32 %v1366, %v1551
        %v1668 = vadd.f32 %v1367, %v1554
        %v1669 = vadd.f32 %v1368, %v1556
        %v1670 = vadd.f32 %v1369, %v1559
        %v1671 = vadd.f32 %v1370, %v1561
        %v1672 = vadd.f32 %v1371, %v1564
        %v1673 = vadd.f32 %v1372, %v1566
        %v1674 = vadd.f32 %v1373, %v1569
        %v1675 = vadd.f32 %v1374, %v1571
        %v1676 = vadd.f32 %v1375, %v1574
        %v1677 = vadd.f32 %v1376, %v1576
        %v1678 = vadd.f32 %v1377, %v1579
        %v1679 = vadd.f32 %v1378, %v1581
        %v1680 = vadd.f32 %v1379, %v1584
        %v1681 = vadd.f32 %v1380, %v1586
        %v1682 = vadd.f32 %v1381, %v1589
        %v1683 = vadd.f32 %v1382, %v1591
        %v1684 = vadd.f32 %v1383, %v1594
        %v1685 = vadd.f32 %v1384, %v1596
        %v1686 = vadd.f32 %v1385, %v1599
        %v1687 = vadd.f32 %v1386, %v1601
        %v1688 = vadd.f32 %v1387, %v1604
        %v1689 = vadd.f32 %v1388, %v1606
        %v1690 = vadd.f32 %v1389, %v1609
        %v1691 = vadd.f32 %v1390, %v1611
        %v1692 = vmul.f32 %v652, 0.10936069
        %v1693 = vmul.f32 %v657, 0.10936069
        %v1694 = vmul.f32 %v662, 0.10936069
        %v1695 = vmul.f32 %v672, 0.10936069
        %v1696 = vmul.f32 %v677, 0.10936069
        %v1697 = vmul.f32 %v682, 0.10936069
        %v1698 = vmul.f32 %v692, 0.10936069
        %v1699 = vmul.f32 %v697, 0.10936069
        %v1700 = vmul.f32 %v702, 0.10936069
        %v1701 = vmul.f32 %v712, 0.10936069
        %v1702 = vmul.f32 %v717, 0.10936069
        %v1703 = vmul.f32 %v722, 0.10936069
        %v1704 = vmul.f32 %v732, 0.10936069
        %v1705 = vmul.f32 %v737, 0.10936069
        %v1706 = vmul.f32 %v742, 0.10936069
        %v1707 = vmul.f32 %v752, 0.10936069
        %v1708 = vmul.f32 %v757, 0.10936069
        %v1709 = vmul.f32 %v762, 0.10936069
        %v1710 = vmul.f32 %v772, 0.10936069
        %v1711 = vmul.f32 %v777, 0.10936069
        %v1712 = vmul.f32 %v782, 0.10936069
        %v1713 = vmul.f32 %v792, 0.10936069
        %v1714 = vmul.f32 %v797, 0.10936069
        %v1715 = vmul.f32 %v802, 0.10936069
        %v1716 = vmul.f32 %v812, 0.10936069
        %v1717 = vmul.f32 %v817, 0.10936069
        %v1718 = vmul.f32 %v822, 0.10936069
        %v1719 = vmul.f32 %v832, 0.10936069
        %v1720 = vmul.f32 %v837, 0.10936069
        %v1721 = vmul.f32 %v842, 0.10936069
        %v1722 = vmul.f32 %v852, 0.10936069
        %v1723 = vmul.f32 %v857, 0.10936069
        %v1724 = vmul.f32 %v862, 0.10936069
        %v1725 = vmul.f32 %v872, 0.10936069
        %v1726 = vmul.f32 %v877, 0.10936069
        %v1727 = vmul.f32 %v882, 0.10936069
        %v1728 = vmul.f32 %v892, 0.10936069
        %v1729 = vmul.f32 %v897, 0.10936069
        %v1730 = vmul.f32 %v902, 0.10936069
        %v1731 = vmul.f32 %v912, 0.10936069
        %v1732 = vmul.f32 %v917, 0.10936069
        %v1733 = vmul.f32 %v922, 0.10936069
        %v1734 = vmul.f32 %v932, 0.10936069
        %v1735 = vmul.f32 %v937, 0.10936069
        %v1736 = vmul.f32 %v942, 0.10936069
        %v1737 = vmul.f32 %v952, 0.10936069
        %v1738 = vmul.f32 %v957, 0.10936069
        %v1739 = vmul.f32 %v962, 0.10936069
        %v1740 = vmul.f32 %v972, 0.10936069
        %v1741 = vmul.f32 %v977, 0.10936069
        %v1742 = vmul.f32 %v982, 0.10936069
        %v1743 = vmul.f32 %v992, 0.10936069
        %v1744 = vmul.f32 %v997, 0.10936069
        %v1745 = vmul.f32 %v1002, 0.10936069
        %v1746 = vmul.f32 %v1012, 0.10936069
        %v1747 = vmul.f32 %v1017, 0.10936069
        %v1748 = vmul.f32 %v1022, 0.10936069
        %v1749 = vmul.f32 %v1032, 0.10936069
        %v1750 = vmul.f32 %v1037, 0.10936069
        %v1751 = vmul.f32 %v1042, 0.10936069
        %vm1812 = vcmask 1044480
        %v1813 = vrot.slane %v1692, 3
        %v1814 = vrot.slane %v1693, 3
        %v1815 = vsel %vm1812, %v1813, %v1814
        %v1816 = vrot.slane %v1694, 3
        %v1817 = vsel %vm1812, %v1814, %v1816
        %v1818 = vrot.slane %v1695, 3
        %v1819 = vrot.slane %v1696, 3
        %v1820 = vsel %vm1812, %v1818, %v1819
        %v1821 = vrot.slane %v1697, 3
        %v1822 = vsel %vm1812, %v1819, %v1821
        %v1823 = vrot.slane %v1698, 3
        %v1824 = vrot.slane %v1699, 3
        %v1825 = vsel %vm1812, %v1823, %v1824
        %v1826 = vrot.slane %v1700, 3
        %v1827 = vsel %vm1812, %v1824, %v1826
        %v1828 = vrot.slane %v1701, 3
        %v1829 = vrot.slane %v1702, 3
        %v1830 = vsel %vm1812, %v1828, %v1829
        %v1831 = vrot.slane %v1703, 3
        %v1832 = vsel %vm1812, %v1829, %v1831
        %v1833 = vrot.slane %v1704, 3
        %v1834 = vrot.slane %v1705, 3
        %v1835 = vsel %vm1812, %v1833, %v1834
        %v1836 = vrot.slane %v1706, 3
        %v1837 = vsel %vm1812, %v1834, %v1836
        %v1838 = vrot.slane %v1707, 3
        %v1839 = vrot.slane %v1708, 3
        %v1840 = vsel %vm1812, %v1838, %v1839
        %v1841 = vrot.slane %v1709, 3
        %v1842 = vsel %vm1812, %v1839, %v1841
        %v1843 = vrot.slane %v1710, 3
        %v1844 = vrot.slane %v1711, 3
        %v1845 = vsel %vm1812, %v1843, %v1844
        %v1846 = vrot.slane %v1712, 3
        %v1847 = vsel %vm1812, %v1844, %v1846
        %v1848 = vrot.slane %v1713, 3
        %v1849 = vrot.slane %v1714, 3
        %v1850 = vsel %vm1812, %v1848, %v1849
        %v1851 = vrot.slane %v1715, 3
        %v1852 = vsel %vm1812, %v1849, %v1851
        %v1853 = vrot.slane %v1716, 3
        %v1854 = vrot.slane %v1717, 3
        %v1855 = vsel %vm1812, %v1853, %v1854
        %v1856 = vrot.slane %v1718, 3
        %v1857 = vsel %vm1812, %v1854, %v1856
        %v1858 = vrot.slane %v1719, 3
        %v1859 = vrot.slane %v1720, 3
        %v1860 = vsel %vm1812, %v1858, %v1859
        %v1861 = vrot.slane %v1721, 3
        %v1862 = vsel %vm1812, %v1859, %v1861
        %v1863 = vrot.slane %v1722, 3
        %v1864 = vrot.slane %v1723, 3
        %v1865 = vsel %vm1812, %v1863, %v1864
        %v1866 = vrot.slane %v1724, 3
        %v1867 = vsel %vm1812, %v1864, %v1866
        %v1868 = vrot.slane %v1725, 3
        %v1869 = vrot.slane %v1726, 3
        %v1870 = vsel %vm1812, %v1868, %v1869
        %v1871 = vrot.slane %v1727, 3
        %v1872 = vsel %vm1812, %v1869, %v1871
        %v1873 = vrot.slane %v1728, 3
        %v1874 = vrot.slane %v1729, 3
        %v1875 = vsel %vm1812, %v1873, %v1874
        %v1876 = vrot.slane %v1730, 3
        %v1877 = vsel %vm1812, %v1874, %v1876
        %v1878 = vrot.slane %v1731, 3
        %v1879 = vrot.slane %v1732, 3
        %v1880 = vsel %vm1812, %v1878, %v1879
        %v1881 = vrot.slane %v1733, 3
        %v1882 = vsel %vm1812, %v1879, %v1881
        %v1883 = vrot.slane %v1734, 3
        %v1884 = vrot.slane %v1735, 3
        %v1885 = vsel %vm1812, %v1883, %v1884
        %v1886 = vrot.slane %v1736, 3
        %v1887 = vsel %vm1812, %v1884, %v1886
        %v1888 = vrot.slane %v1737, 3
        %v1889 = vrot.slane %v1738, 3
        %v1890 = vsel %vm1812, %v1888, %v1889
        %v1891 = vrot.slane %v1739, 3
        %v1892 = vsel %vm1812, %v1889, %v1891
        %v1893 = vrot.slane %v1740, 3
        %v1894 = vrot.slane %v1741, 3
        %v1895 = vsel %vm1812, %v1893, %v1894
        %v1896 = vrot.slane %v1742, 3
        %v1897 = vsel %vm1812, %v1894, %v1896
        %v1898 = vrot.slane %v1743, 3
        %v1899 = vrot.slane %v1744, 3
        %v1900 = vsel %vm1812, %v1898, %v1899
        %v1901 = vrot.slane %v1745, 3
        %v1902 = vsel %vm1812, %v1899, %v1901
        %v1903 = vrot.slane %v1746, 3
        %v1904 = vrot.slane %v1747, 3
        %v1905 = vsel %vm1812, %v1903, %v1904
        %v1906 = vrot.slane %v1748, 3
        %v1907 = vsel %vm1812, %v1904, %v1906
        %v1908 = vrot.slane %v1749, 3
        %v1909 = vrot.slane %v1750, 3
        %v1910 = vsel %vm1812, %v1908, %v1909
        %v1911 = vrot.slane %v1751, 3
        %v1912 = vsel %vm1812, %v1909, %v1911
        %v1953 = vadd.f32 %v1652, %v1815
        %v1954 = vadd.f32 %v1653, %v1817
        %v1955 = vadd.f32 %v1654, %v1820
        %v1956 = vadd.f32 %v1655, %v1822
        %v1957 = vadd.f32 %v1656, %v1825
        %v1958 = vadd.f32 %v1657, %v1827
        %v1959 = vadd.f32 %v1658, %v1830
        %v1960 = vadd.f32 %v1659, %v1832
        %v1961 = vadd.f32 %v1660, %v1835
        %v1962 = vadd.f32 %v1661, %v1837
        %v1963 = vadd.f32 %v1662, %v1840
        %v1964 = vadd.f32 %v1663, %v1842
        %v1965 = vadd.f32 %v1664, %v1845
        %v1966 = vadd.f32 %v1665, %v1847
        %v1967 = vadd.f32 %v1666, %v1850
        %v1968 = vadd.f32 %v1667, %v1852
        %v1969 = vadd.f32 %v1668, %v1855
        %v1970 = vadd.f32 %v1669, %v1857
        %v1971 = vadd.f32 %v1670, %v1860
        %v1972 = vadd.f32 %v1671, %v1862
        %v1973 = vadd.f32 %v1672, %v1865
        %v1974 = vadd.f32 %v1673, %v1867
        %v1975 = vadd.f32 %v1674, %v1870
        %v1976 = vadd.f32 %v1675, %v1872
        %v1977 = vadd.f32 %v1676, %v1875
        %v1978 = vadd.f32 %v1677, %v1877
        %v1979 = vadd.f32 %v1678, %v1880
        %v1980 = vadd.f32 %v1679, %v1882
        %v1981 = vadd.f32 %v1680, %v1885
        %v1982 = vadd.f32 %v1681, %v1887
        %v1983 = vadd.f32 %v1682, %v1890
        %v1984 = vadd.f32 %v1683, %v1892
        %v1985 = vadd.f32 %v1684, %v1895
        %v1986 = vadd.f32 %v1685, %v1897
        %v1987 = vadd.f32 %v1686, %v1900
        %v1988 = vadd.f32 %v1687, %v1902
        %v1989 = vadd.f32 %v1688, %v1905
        %v1990 = vadd.f32 %v1689, %v1907
        %v1991 = vadd.f32 %v1690, %v1910
        %v1992 = vadd.f32 %v1691, %v1912
        %v1993 = vmul.f32 %v652, 0.21300554
        %v1994 = vmul.f32 %v657, 0.21300554
        %v1995 = vmul.f32 %v662, 0.21300554
        %v1996 = vmul.f32 %v672, 0.21300554
        %v1997 = vmul.f32 %v677, 0.21300554
        %v1998 = vmul.f32 %v682, 0.21300554
        %v1999 = vmul.f32 %v692, 0.21300554
        %v2000 = vmul.f32 %v697, 0.21300554
        %v2001 = vmul.f32 %v702, 0.21300554
        %v2002 = vmul.f32 %v712, 0.21300554
        %v2003 = vmul.f32 %v717, 0.21300554
        %v2004 = vmul.f32 %v722, 0.21300554
        %v2005 = vmul.f32 %v732, 0.21300554
        %v2006 = vmul.f32 %v737, 0.21300554
        %v2007 = vmul.f32 %v742, 0.21300554
        %v2008 = vmul.f32 %v752, 0.21300554
        %v2009 = vmul.f32 %v757, 0.21300554
        %v2010 = vmul.f32 %v762, 0.21300554
        %v2011 = vmul.f32 %v772, 0.21300554
        %v2012 = vmul.f32 %v777, 0.21300554
        %v2013 = vmul.f32 %v782, 0.21300554
        %v2014 = vmul.f32 %v792, 0.21300554
        %v2015 = vmul.f32 %v797, 0.21300554
        %v2016 = vmul.f32 %v802, 0.21300554
        %v2017 = vmul.f32 %v812, 0.21300554
        %v2018 = vmul.f32 %v817, 0.21300554
        %v2019 = vmul.f32 %v822, 0.21300554
        %v2020 = vmul.f32 %v832, 0.21300554
        %v2021 = vmul.f32 %v837, 0.21300554
        %v2022 = vmul.f32 %v842, 0.21300554
        %v2023 = vmul.f32 %v852, 0.21300554
        %v2024 = vmul.f32 %v857, 0.21300554
        %v2025 = vmul.f32 %v862, 0.21300554
        %v2026 = vmul.f32 %v872, 0.21300554
        %v2027 = vmul.f32 %v877, 0.21300554
        %v2028 = vmul.f32 %v882, 0.21300554
        %v2029 = vmul.f32 %v892, 0.21300554
        %v2030 = vmul.f32 %v897, 0.21300554
        %v2031 = vmul.f32 %v902, 0.21300554
        %v2032 = vmul.f32 %v912, 0.21300554
        %v2033 = vmul.f32 %v917, 0.21300554
        %v2034 = vmul.f32 %v922, 0.21300554
        %v2035 = vmul.f32 %v932, 0.21300554
        %v2036 = vmul.f32 %v937, 0.21300554
        %v2037 = vmul.f32 %v942, 0.21300554
        %v2038 = vmul.f32 %v952, 0.21300554
        %v2039 = vmul.f32 %v957, 0.21300554
        %v2040 = vmul.f32 %v962, 0.21300554
        %v2041 = vmul.f32 %v972, 0.21300554
        %v2042 = vmul.f32 %v977, 0.21300554
        %v2043 = vmul.f32 %v982, 0.21300554
        %v2044 = vmul.f32 %v992, 0.21300554
        %v2045 = vmul.f32 %v997, 0.21300554
        %v2046 = vmul.f32 %v1002, 0.21300554
        %v2047 = vmul.f32 %v1012, 0.21300554
        %v2048 = vmul.f32 %v1017, 0.21300554
        %v2049 = vmul.f32 %v1022, 0.21300554
        %v2050 = vmul.f32 %v1032, 0.21300554
        %v2051 = vmul.f32 %v1037, 0.21300554
        %v2052 = vmul.f32 %v1042, 0.21300554
        %vm2113 = vcmask 1043456
        %v2114 = vrot.slane %v1993, 4
        %v2115 = vrot.slane %v1994, 4
        %v2116 = vsel %vm2113, %v2114, %v2115
        %v2117 = vrot.slane %v1995, 4
        %v2118 = vsel %vm2113, %v2115, %v2117
        %v2119 = vrot.slane %v1996, 4
        %v2120 = vrot.slane %v1997, 4
        %v2121 = vsel %vm2113, %v2119, %v2120
        %v2122 = vrot.slane %v1998, 4
        %v2123 = vsel %vm2113, %v2120, %v2122
        %v2124 = vrot.slane %v1999, 4
        %v2125 = vrot.slane %v2000, 4
        %v2126 = vsel %vm2113, %v2124, %v2125
        %v2127 = vrot.slane %v2001, 4
        %v2128 = vsel %vm2113, %v2125, %v2127
        %v2129 = vrot.slane %v2002, 4
        %v2130 = vrot.slane %v2003, 4
        %v2131 = vsel %vm2113, %v2129, %v2130
        %v2132 = vrot.slane %v2004, 4
        %v2133 = vsel %vm2113, %v2130, %v2132
        %v2134 = vrot.slane %v2005, 4
        %v2135 = vrot.slane %v2006, 4
        %v2136 = vsel %vm2113, %v2134, %v2135
        %v2137 = vrot.slane %v2007, 4
        %v2138 = vsel %vm2113, %v2135, %v2137
        %v2139 = vrot.slane %v2008, 4
        %v2140 = vrot.slane %v2009, 4
        %v2141 = vsel %vm2113, %v2139, %v2140
        %v2142 = vrot.slane %v2010, 4
        %v2143 = vsel %vm2113, %v2140, %v2142
        %v2144 = vrot.slane %v2011, 4
        %v2145 = vrot.slane %v2012, 4
        %v2146 = vsel %vm2113, %v2144, %v2145
        %v2147 = vrot.slane %v2013, 4
        %v2148 = vsel %vm2113, %v2145, %v2147
        %v2149 = vrot.slane %v2014, 4
        %v2150 = vrot.slane %v2015, 4
        %v2151 = vsel %vm2113, %v2149, %v2150
        %v2152 = vrot.slane %v2016, 4
        %v2153 = vsel %vm2113, %v2150, %v2152
        %v2154 = vrot.slane %v2017, 4
        %v2155 = vrot.slane %v2018, 4
        %v2156 = vsel %vm2113, %v2154, %v2155
        %v2157 = vrot.slane %v2019, 4
        %v2158 = vsel %vm2113, %v2155, %v2157
        %v2159 = vrot.slane %v2020, 4
        %v2160 = vrot.slane %v2021, 4
        %v2161 = vsel %vm2113, %v2159, %v2160
        %v2162 = vrot.slane %v2022, 4
        %v2163 = vsel %vm2113, %v2160, %v2162
        %v2164 = vrot.slane %v2023, 4
        %v2165 = vrot.slane %v2024, 4
        %v2166 = vsel %vm2113, %v2164, %v2165
        %v2167 = vrot.slane %v2025, 4
        %v2168 = vsel %vm2113, %v2165, %v2167
        %v2169 = vrot.slane %v2026, 4
        %v2170 = vrot.slane %v2027, 4
        %v2171 = vsel %vm2113, %v2169, %v2170
        %v2172 = vrot.slane %v2028, 4
        %v2173 = vsel %vm2113, %v2170, %v2172
        %v2174 = vrot.slane %v2029, 4
        %v2175 = vrot.slane %v2030, 4
        %v2176 = vsel %vm2113, %v2174, %v2175
        %v2177 = vrot.slane %v2031, 4
        %v2178 = vsel %vm2113, %v2175, %v2177
        %v2179 = vrot.slane %v2032, 4
        %v2180 = vrot.slane %v2033, 4
        %v2181 = vsel %vm2113, %v2179, %v2180
        %v2182 = vrot.slane %v2034, 4
        %v2183 = vsel %vm2113, %v2180, %v2182
        %v2184 = vrot.slane %v2035, 4
        %v2185 = vrot.slane %v2036, 4
        %v2186 = vsel %vm2113, %v2184, %v2185
        %v2187 = vrot.slane %v2037, 4
        %v2188 = vsel %vm2113, %v2185, %v2187
        %v2189 = vrot.slane %v2038, 4
        %v2190 = vrot.slane %v2039, 4
        %v2191 = vsel %vm2113, %v2189, %v2190
        %v2192 = vrot.slane %v2040, 4
        %v2193 = vsel %vm2113, %v2190, %v2192
        %v2194 = vrot.slane %v2041, 4
        %v2195 = vrot.slane %v2042, 4
        %v2196 = vsel %vm2113, %v2194, %v2195
        %v2197 = vrot.slane %v2043, 4
        %v2198 = vsel %vm2113, %v2195, %v2197
        %v2199 = vrot.slane %v2044, 4
        %v2200 = vrot.slane %v2045, 4
        %v2201 = vsel %vm2113, %v2199, %v2200
        %v2202 = vrot.slane %v2046, 4
        %v2203 = vsel %vm2113, %v2200, %v2202
        %v2204 = vrot.slane %v2047, 4
        %v2205 = vrot.slane %v2048, 4
        %v2206 = vsel %vm2113, %v2204, %v2205
        %v2207 = vrot.slane %v2049, 4
        %v2208 = vsel %vm2113, %v2205, %v2207
        %v2209 = vrot.slane %v2050, 4
        %v2210 = vrot.slane %v2051, 4
        %v2211 = vsel %vm2113, %v2209, %v2210
        %v2212 = vrot.slane %v2052, 4
        %v2213 = vsel %vm2113, %v2210, %v2212
        %v2254 = vadd.f32 %v1953, %v2116
        %v2255 = vadd.f32 %v1954, %v2118
        %v2256 = vadd.f32 %v1955, %v2121
        %v2257 = vadd.f32 %v1956, %v2123
        %v2258 = vadd.f32 %v1957, %v2126
        %v2259 = vadd.f32 %v1958, %v2128
        %v2260 = vadd.f32 %v1959, %v2131
        %v2261 = vadd.f32 %v1960, %v2133
        %v2262 = vadd.f32 %v1961, %v2136
        %v2263 = vadd.f32 %v1962, %v2138
        %v2264 = vadd.f32 %v1963, %v2141
        %v2265 = vadd.f32 %v1964, %v2143
        %v2266 = vadd.f32 %v1965, %v2146
        %v2267 = vadd.f32 %v1966, %v2148
        %v2268 = vadd.f32 %v1967, %v2151
        %v2269 = vadd.f32 %v1968, %v2153
        %v2270 = vadd.f32 %v1969, %v2156
        %v2271 = vadd.f32 %v1970, %v2158
        %v2272 = vadd.f32 %v1971, %v2161
        %v2273 = vadd.f32 %v1972, %v2163
        %v2274 = vadd.f32 %v1973, %v2166
        %v2275 = vadd.f32 %v1974, %v2168
        %v2276 = vadd.f32 %v1975, %v2171
        %v2277 = vadd.f32 %v1976, %v2173
        %v2278 = vadd.f32 %v1977, %v2176
        %v2279 = vadd.f32 %v1978, %v2178
        %v2280 = vadd.f32 %v1979, %v2181
        %v2281 = vadd.f32 %v1980, %v2183
        %v2282 = vadd.f32 %v1981, %v2186
        %v2283 = vadd.f32 %v1982, %v2188
        %v2284 = vadd.f32 %v1983, %v2191
        %v2285 = vadd.f32 %v1984, %v2193
        %v2286 = vadd.f32 %v1985, %v2196
        %v2287 = vadd.f32 %v1986, %v2198
        %v2288 = vadd.f32 %v1987, %v2201
        %v2289 = vadd.f32 %v1988, %v2203
        %v2290 = vadd.f32 %v1989, %v2206
        %v2291 = vadd.f32 %v1990, %v2208
        %v2292 = vadd.f32 %v1991, %v2211
        %v2293 = vadd.f32 %v1992, %v2213
        %v2294 = vmul.f32 %v652, 0.26601171
        %v2295 = vmul.f32 %v657, 0.26601171
        %v2296 = vmul.f32 %v662, 0.26601171
        %v2297 = vmul.f32 %v672, 0.26601171
        %v2298 = vmul.f32 %v677, 0.26601171
        %v2299 = vmul.f32 %v682, 0.26601171
        %v2300 = vmul.f32 %v692, 0.26601171
        %v2301 = vmul.f32 %v697, 0.26601171
        %v2302 = vmul.f32 %v702, 0.26601171
        %v2303 = vmul.f32 %v712, 0.26601171
        %v2304 = vmul.f32 %v717, 0.26601171
        %v2305 = vmul.f32 %v722, 0.26601171
        %v2306 = vmul.f32 %v732, 0.26601171
        %v2307 = vmul.f32 %v737, 0.26601171
        %v2308 = vmul.f32 %v742, 0.26601171
        %v2309 = vmul.f32 %v752, 0.26601171
        %v2310 = vmul.f32 %v757, 0.26601171
        %v2311 = vmul.f32 %v762, 0.26601171
        %v2312 = vmul.f32 %v772, 0.26601171
        %v2313 = vmul.f32 %v777, 0.26601171
        %v2314 = vmul.f32 %v782, 0.26601171
        %v2315 = vmul.f32 %v792, 0.26601171
        %v2316 = vmul.f32 %v797, 0.26601171
        %v2317 = vmul.f32 %v802, 0.26601171
        %v2318 = vmul.f32 %v812, 0.26601171
        %v2319 = vmul.f32 %v817, 0.26601171
        %v2320 = vmul.f32 %v822, 0.26601171
        %v2321 = vmul.f32 %v832, 0.26601171
        %v2322 = vmul.f32 %v837, 0.26601171
        %v2323 = vmul.f32 %v842, 0.26601171
        %v2324 = vmul.f32 %v852, 0.26601171
        %v2325 = vmul.f32 %v857, 0.26601171
        %v2326 = vmul.f32 %v862, 0.26601171
        %v2327 = vmul.f32 %v872, 0.26601171
        %v2328 = vmul.f32 %v877, 0.26601171
        %v2329 = vmul.f32 %v882, 0.26601171
        %v2330 = vmul.f32 %v892, 0.26601171
        %v2331 = vmul.f32 %v897, 0.26601171
        %v2332 = vmul.f32 %v902, 0.26601171
        %v2333 = vmul.f32 %v912, 0.26601171
        %v2334 = vmul.f32 %v917, 0.26601171
        %v2335 = vmul.f32 %v922, 0.26601171
        %v2336 = vmul.f32 %v932, 0.26601171
        %v2337 = vmul.f32 %v937, 0.26601171
        %v2338 = vmul.f32 %v942, 0.26601171
        %v2339 = vmul.f32 %v952, 0.26601171
        %v2340 = vmul.f32 %v957, 0.26601171
        %v2341 = vmul.f32 %v962, 0.26601171
        %v2342 = vmul.f32 %v972, 0.26601171
        %v2343 = vmul.f32 %v977, 0.26601171
        %v2344 = vmul.f32 %v982, 0.26601171
        %v2345 = vmul.f32 %v992, 0.26601171
        %v2346 = vmul.f32 %v997, 0.26601171
        %v2347 = vmul.f32 %v1002, 0.26601171
        %v2348 = vmul.f32 %v1012, 0.26601171
        %v2349 = vmul.f32 %v1017, 0.26601171
        %v2350 = vmul.f32 %v1022, 0.26601171
        %v2351 = vmul.f32 %v1032, 0.26601171
        %v2352 = vmul.f32 %v1037, 0.26601171
        %v2353 = vmul.f32 %v1042, 0.26601171
        %vm2414 = vcmask 1042432
        %v2415 = vrot.slane %v2294, 5
        %v2416 = vrot.slane %v2295, 5
        %v2417 = vsel %vm2414, %v2415, %v2416
        %v2418 = vrot.slane %v2296, 5
        %v2419 = vsel %vm2414, %v2416, %v2418
        %v2420 = vrot.slane %v2297, 5
        %v2421 = vrot.slane %v2298, 5
        %v2422 = vsel %vm2414, %v2420, %v2421
        %v2423 = vrot.slane %v2299, 5
        %v2424 = vsel %vm2414, %v2421, %v2423
        %v2425 = vrot.slane %v2300, 5
        %v2426 = vrot.slane %v2301, 5
        %v2427 = vsel %vm2414, %v2425, %v2426
        %v2428 = vrot.slane %v2302, 5
        %v2429 = vsel %vm2414, %v2426, %v2428
        %v2430 = vrot.slane %v2303, 5
        %v2431 = vrot.slane %v2304, 5
        %v2432 = vsel %vm2414, %v2430, %v2431
        %v2433 = vrot.slane %v2305, 5
        %v2434 = vsel %vm2414, %v2431, %v2433
        %v2435 = vrot.slane %v2306, 5
        %v2436 = vrot.slane %v2307, 5
        %v2437 = vsel %vm2414, %v2435, %v2436
        %v2438 = vrot.slane %v2308, 5
        %v2439 = vsel %vm2414, %v2436, %v2438
        %v2440 = vrot.slane %v2309, 5
        %v2441 = vrot.slane %v2310, 5
        %v2442 = vsel %vm2414, %v2440, %v2441
        %v2443 = vrot.slane %v2311, 5
        %v2444 = vsel %vm2414, %v2441, %v2443
        %v2445 = vrot.slane %v2312, 5
        %v2446 = vrot.slane %v2313, 5
        %v2447 = vsel %vm2414, %v2445, %v2446
        %v2448 = vrot.slane %v2314, 5
        %v2449 = vsel %vm2414, %v2446, %v2448
        %v2450 = vrot.slane %v2315, 5
        %v2451 = vrot.slane %v2316, 5
        %v2452 = vsel %vm2414, %v2450, %v2451
        %v2453 = vrot.slane %v2317, 5
        %v2454 = vsel %vm2414, %v2451, %v2453
        %v2455 = vrot.slane %v2318, 5
        %v2456 = vrot.slane %v2319, 5
        %v2457 = vsel %vm2414, %v2455, %v2456
        %v2458 = vrot.slane %v2320, 5
        %v2459 = vsel %vm2414, %v2456, %v2458
        %v2460 = vrot.slane %v2321, 5
        %v2461 = vrot.slane %v2322, 5
        %v2462 = vsel %vm2414, %v2460, %v2461
        %v2463 = vrot.slane %v2323, 5
        %v2464 = vsel %vm2414, %v2461, %v2463
        %v2465 = vrot.slane %v2324, 5
        %v2466 = vrot.slane %v2325, 5
        %v2467 = vsel %vm2414, %v2465, %v2466
        %v2468 = vrot.slane %v2326, 5
        %v2469 = vsel %vm2414, %v2466, %v2468
        %v2470 = vrot.slane %v2327, 5
        %v2471 = vrot.slane %v2328, 5
        %v2472 = vsel %vm2414, %v2470, %v2471
        %v2473 = vrot.slane %v2329, 5
        %v2474 = vsel %vm2414, %v2471, %v2473
        %v2475 = vrot.slane %v2330, 5
        %v2476 = vrot.slane %v2331, 5
        %v2477 = vsel %vm2414, %v2475, %v2476
        %v2478 = vrot.slane %v2332, 5
        %v2479 = vsel %vm2414, %v2476, %v2478
        %v2480 = vrot.slane %v2333, 5
        %v2481 = vrot.slane %v2334, 5
        %v2482 = vsel %vm2414, %v2480, %v2481
        %v2483 = vrot.slane %v2335, 5
        %v2484 = vsel %vm2414, %v2481, %v2483
        %v2485 = vrot.slane %v2336, 5
        %v2486 = vrot.slane %v2337, 5
        %v2487 = vsel %vm2414, %v2485, %v2486
        %v2488 = vrot.slane %v2338, 5
        %v2489 = vsel %vm2414, %v2486, %v2488
        %v2490 = vrot.slane %v2339, 5
        %v2491 = vrot.slane %v2340, 5
        %v2492 = vsel %vm2414, %v2490, %v2491
        %v2493 = vrot.slane %v2341, 5
        %v2494 = vsel %vm2414, %v2491, %v2493
        %v2495 = vrot.slane %v2342, 5
        %v2496 = vrot.slane %v2343, 5
        %v2497 = vsel %vm2414, %v2495, %v2496
        %v2498 = vrot.slane %v2344, 5
        %v2499 = vsel %vm2414, %v2496, %v2498
        %v2500 = vrot.slane %v2345, 5
        %v2501 = vrot.slane %v2346, 5
        %v2502 = vsel %vm2414, %v2500, %v2501
        %v2503 = vrot.slane %v2347, 5
        %v2504 = vsel %vm2414, %v2501, %v2503
        %v2505 = vrot.slane %v2348, 5
        %v2506 = vrot.slane %v2349, 5
        %v2507 = vsel %vm2414, %v2505, %v2506
        %v2508 = vrot.slane %v2350, 5
        %v2509 = vsel %vm2414, %v2506, %v2508
        %v2510 = vrot.slane %v2351, 5
        %v2511 = vrot.slane %v2352, 5
        %v2512 = vsel %vm2414, %v2510, %v2511
        %v2513 = vrot.slane %v2353, 5
        %v2514 = vsel %vm2414, %v2511, %v2513
        %v2555 = vadd.f32 %v2254, %v2417
        %v2556 = vadd.f32 %v2255, %v2419
        %v2557 = vadd.f32 %v2256, %v2422
        %v2558 = vadd.f32 %v2257, %v2424
        %v2559 = vadd.f32 %v2258, %v2427
        %v2560 = vadd.f32 %v2259, %v2429
        %v2561 = vadd.f32 %v2260, %v2432
        %v2562 = vadd.f32 %v2261, %v2434
        %v2563 = vadd.f32 %v2262, %v2437
        %v2564 = vadd.f32 %v2263, %v2439
        %v2565 = vadd.f32 %v2264, %v2442
        %v2566 = vadd.f32 %v2265, %v2444
        %v2567 = vadd.f32 %v2266, %v2447
        %v2568 = vadd.f32 %v2267, %v2449
        %v2569 = vadd.f32 %v2268, %v2452
        %v2570 = vadd.f32 %v2269, %v2454
        %v2571 = vadd.f32 %v2270, %v2457
        %v2572 = vadd.f32 %v2271, %v2459
        %v2573 = vadd.f32 %v2272, %v2462
        %v2574 = vadd.f32 %v2273, %v2464
        %v2575 = vadd.f32 %v2274, %v2467
        %v2576 = vadd.f32 %v2275, %v2469
        %v2577 = vadd.f32 %v2276, %v2472
        %v2578 = vadd.f32 %v2277, %v2474
        %v2579 = vadd.f32 %v2278, %v2477
        %v2580 = vadd.f32 %v2279, %v2479
        %v2581 = vadd.f32 %v2280, %v2482
        %v2582 = vadd.f32 %v2281, %v2484
        %v2583 = vadd.f32 %v2282, %v2487
        %v2584 = vadd.f32 %v2283, %v2489
        %v2585 = vadd.f32 %v2284, %v2492
        %v2586 = vadd.f32 %v2285, %v2494
        %v2587 = vadd.f32 %v2286, %v2497
        %v2588 = vadd.f32 %v2287, %v2499
        %v2589 = vadd.f32 %v2288, %v2502
        %v2590 = vadd.f32 %v2289, %v2504
        %v2591 = vadd.f32 %v2290, %v2507
        %v2592 = vadd.f32 %v2291, %v2509
        %v2593 = vadd.f32 %v2292, %v2512
        %v2594 = vadd.f32 %v2293, %v2514
        %vm2595 = vcmask 1041408
        %v2596 = vrot.slane %v1993, 6
        %v2597 = vrot.slane %v1994, 6
        %v2598 = vsel %vm2595, %v2596, %v2597
        %v2599 = vrot.slane %v1995, 6
        %v2600 = vsel %vm2595, %v2597, %v2599
        %v2601 = vrot.slane %v1996, 6
        %v2602 = vrot.slane %v1997, 6
        %v2603 = vsel %vm2595, %v2601, %v2602
        %v2604 = vrot.slane %v1998, 6
        %v2605 = vsel %vm2595, %v2602, %v2604
        %v2606 = vrot.slane %v1999, 6
        %v2607 = vrot.slane %v2000, 6
        %v2608 = vsel %vm2595, %v2606, %v2607
        %v2609 = vrot.slane %v2001, 6
        %v2610 = vsel %vm2595, %v2607, %v2609
        %v2611 = vrot.slane %v2002, 6
        %v2612 = vrot.slane %v2003, 6
        %v2613 = vsel %vm2595, %v2611, %v2612
        %v2614 = vrot.slane %v2004, 6
        %v2615 = vsel %vm2595, %v2612, %v2614
        %v2616 = vrot.slane %v2005, 6
        %v2617 = vrot.slane %v2006, 6
        %v2618 = vsel %vm2595, %v2616, %v2617
        %v2619 = vrot.slane %v2007, 6
        %v2620 = vsel %vm2595, %v2617, %v2619
        %v2621 = vrot.slane %v2008, 6
        %v2622 = vrot.slane %v2009, 6
        %v2623 = vsel %vm2595, %v2621, %v2622
        %v2624 = vrot.slane %v2010, 6
        %v2625 = vsel %vm2595, %v2622, %v2624
        %v2626 = vrot.slane %v2011, 6
        %v2627 = vrot.slane %v2012, 6
        %v2628 = vsel %vm2595, %v2626, %v2627
        %v2629 = vrot.slane %v2013, 6
        %v2630 = vsel %vm2595, %v2627, %v2629
        %v2631 = vrot.slane %v2014, 6
        %v2632 = vrot.slane %v2015, 6
        %v2633 = vsel %vm2595, %v2631, %v2632
        %v2634 = vrot.slane %v2016, 6
        %v2635 = vsel %vm2595, %v2632, %v2634
        %v2636 = vrot.slane %v2017, 6
        %v2637 = vrot.slane %v2018, 6
        %v2638 = vsel %vm2595, %v2636, %v2637
        %v2639 = vrot.slane %v2019, 6
        %v2640 = vsel %vm2595, %v2637, %v2639
        %v2641 = vrot.slane %v2020, 6
        %v2642 = vrot.slane %v2021, 6
        %v2643 = vsel %vm2595, %v2641, %v2642
        %v2644 = vrot.slane %v2022, 6
        %v2645 = vsel %vm2595, %v2642, %v2644
        %v2646 = vrot.slane %v2023, 6
        %v2647 = vrot.slane %v2024, 6
        %v2648 = vsel %vm2595, %v2646, %v2647
        %v2649 = vrot.slane %v2025, 6
        %v2650 = vsel %vm2595, %v2647, %v2649
        %v2651 = vrot.slane %v2026, 6
        %v2652 = vrot.slane %v2027, 6
        %v2653 = vsel %vm2595, %v2651, %v2652
        %v2654 = vrot.slane %v2028, 6
        %v2655 = vsel %vm2595, %v2652, %v2654
        %v2656 = vrot.slane %v2029, 6
        %v2657 = vrot.slane %v2030, 6
        %v2658 = vsel %vm2595, %v2656, %v2657
        %v2659 = vrot.slane %v2031, 6
        %v2660 = vsel %vm2595, %v2657, %v2659
        %v2661 = vrot.slane %v2032, 6
        %v2662 = vrot.slane %v2033, 6
        %v2663 = vsel %vm2595, %v2661, %v2662
        %v2664 = vrot.slane %v2034, 6
        %v2665 = vsel %vm2595, %v2662, %v2664
        %v2666 = vrot.slane %v2035, 6
        %v2667 = vrot.slane %v2036, 6
        %v2668 = vsel %vm2595, %v2666, %v2667
        %v2669 = vrot.slane %v2037, 6
        %v2670 = vsel %vm2595, %v2667, %v2669
        %v2671 = vrot.slane %v2038, 6
        %v2672 = vrot.slane %v2039, 6
        %v2673 = vsel %vm2595, %v2671, %v2672
        %v2674 = vrot.slane %v2040, 6
        %v2675 = vsel %vm2595, %v2672, %v2674
        %v2676 = vrot.slane %v2041, 6
        %v2677 = vrot.slane %v2042, 6
        %v2678 = vsel %vm2595, %v2676, %v2677
        %v2679 = vrot.slane %v2043, 6
        %v2680 = vsel %vm2595, %v2677, %v2679
        %v2681 = vrot.slane %v2044, 6
        %v2682 = vrot.slane %v2045, 6
        %v2683 = vsel %vm2595, %v2681, %v2682
        %v2684 = vrot.slane %v2046, 6
        %v2685 = vsel %vm2595, %v2682, %v2684
        %v2686 = vrot.slane %v2047, 6
        %v2687 = vrot.slane %v2048, 6
        %v2688 = vsel %vm2595, %v2686, %v2687
        %v2689 = vrot.slane %v2049, 6
        %v2690 = vsel %vm2595, %v2687, %v2689
        %v2691 = vrot.slane %v2050, 6
        %v2692 = vrot.slane %v2051, 6
        %v2693 = vsel %vm2595, %v2691, %v2692
        %v2694 = vrot.slane %v2052, 6
        %v2695 = vsel %vm2595, %v2692, %v2694
        %v2736 = vadd.f32 %v2555, %v2598
        %v2737 = vadd.f32 %v2556, %v2600
        %v2738 = vadd.f32 %v2557, %v2603
        %v2739 = vadd.f32 %v2558, %v2605
        %v2740 = vadd.f32 %v2559, %v2608
        %v2741 = vadd.f32 %v2560, %v2610
        %v2742 = vadd.f32 %v2561, %v2613
        %v2743 = vadd.f32 %v2562, %v2615
        %v2744 = vadd.f32 %v2563, %v2618
        %v2745 = vadd.f32 %v2564, %v2620
        %v2746 = vadd.f32 %v2565, %v2623
        %v2747 = vadd.f32 %v2566, %v2625
        %v2748 = vadd.f32 %v2567, %v2628
        %v2749 = vadd.f32 %v2568, %v2630
        %v2750 = vadd.f32 %v2569, %v2633
        %v2751 = vadd.f32 %v2570, %v2635
        %v2752 = vadd.f32 %v2571, %v2638
        %v2753 = vadd.f32 %v2572, %v2640
        %v2754 = vadd.f32 %v2573, %v2643
        %v2755 = vadd.f32 %v2574, %v2645
        %v2756 = vadd.f32 %v2575, %v2648
        %v2757 = vadd.f32 %v2576, %v2650
        %v2758 = vadd.f32 %v2577, %v2653
        %v2759 = vadd.f32 %v2578, %v2655
        %v2760 = vadd.f32 %v2579, %v2658
        %v2761 = vadd.f32 %v2580, %v2660
        %v2762 = vadd.f32 %v2581, %v2663
        %v2763 = vadd.f32 %v2582, %v2665
        %v2764 = vadd.f32 %v2583, %v2668
        %v2765 = vadd.f32 %v2584, %v2670
        %v2766 = vadd.f32 %v2585, %v2673
        %v2767 = vadd.f32 %v2586, %v2675
        %v2768 = vadd.f32 %v2587, %v2678
        %v2769 = vadd.f32 %v2588, %v2680
        %v2770 = vadd.f32 %v2589, %v2683
        %v2771 = vadd.f32 %v2590, %v2685
        %v2772 = vadd.f32 %v2591, %v2688
        %v2773 = vadd.f32 %v2592, %v2690
        %v2774 = vadd.f32 %v2593, %v2693
        %v2775 = vadd.f32 %v2594, %v2695
        %vm2776 = vcmask 1040384
        %v2777 = vrot.slane %v1692, 7
        %v2778 = vrot.slane %v1693, 7
        %v2779 = vsel %vm2776, %v2777, %v2778
        %v2780 = vrot.slane %v1694, 7
        %v2781 = vsel %vm2776, %v2778, %v2780
        %v2782 = vrot.slane %v1695, 7
        %v2783 = vrot.slane %v1696, 7
        %v2784 = vsel %vm2776, %v2782, %v2783
        %v2785 = vrot.slane %v1697, 7
        %v2786 = vsel %vm2776, %v2783, %v2785
        %v2787 = vrot.slane %v1698, 7
        %v2788 = vrot.slane %v1699, 7
        %v2789 = vsel %vm2776, %v2787, %v2788
        %v2790 = vrot.slane %v1700, 7
        %v2791 = vsel %vm2776, %v2788, %v2790
        %v2792 = vrot.slane %v1701, 7
        %v2793 = vrot.slane %v1702, 7
        %v2794 = vsel %vm2776, %v2792, %v2793
        %v2795 = vrot.slane %v1703, 7
        %v2796 = vsel %vm2776, %v2793, %v2795
        %v2797 = vrot.slane %v1704, 7
        %v2798 = vrot.slane %v1705, 7
        %v2799 = vsel %vm2776, %v2797, %v2798
        %v2800 = vrot.slane %v1706, 7
        %v2801 = vsel %vm2776, %v2798, %v2800
        %v2802 = vrot.slane %v1707, 7
        %v2803 = vrot.slane %v1708, 7
        %v2804 = vsel %vm2776, %v2802, %v2803
        %v2805 = vrot.slane %v1709, 7
        %v2806 = vsel %vm2776, %v2803, %v2805
        %v2807 = vrot.slane %v1710, 7
        %v2808 = vrot.slane %v1711, 7
        %v2809 = vsel %vm2776, %v2807, %v2808
        %v2810 = vrot.slane %v1712, 7
        %v2811 = vsel %vm2776, %v2808, %v2810
        %v2812 = vrot.slane %v1713, 7
        %v2813 = vrot.slane %v1714, 7
        %v2814 = vsel %vm2776, %v2812, %v2813
        %v2815 = vrot.slane %v1715, 7
        %v2816 = vsel %vm2776, %v2813, %v2815
        %v2817 = vrot.slane %v1716, 7
        %v2818 = vrot.slane %v1717, 7
        %v2819 = vsel %vm2776, %v2817, %v2818
        %v2820 = vrot.slane %v1718, 7
        %v2821 = vsel %vm2776, %v2818, %v2820
        %v2822 = vrot.slane %v1719, 7
        %v2823 = vrot.slane %v1720, 7
        %v2824 = vsel %vm2776, %v2822, %v2823
        %v2825 = vrot.slane %v1721, 7
        %v2826 = vsel %vm2776, %v2823, %v2825
        %v2827 = vrot.slane %v1722, 7
        %v2828 = vrot.slane %v1723, 7
        %v2829 = vsel %vm2776, %v2827, %v2828
        %v2830 = vrot.slane %v1724, 7
        %v2831 = vsel %vm2776, %v2828, %v2830
        %v2832 = vrot.slane %v1725, 7
        %v2833 = vrot.slane %v1726, 7
        %v2834 = vsel %vm2776, %v2832, %v2833
        %v2835 = vrot.slane %v1727, 7
        %v2836 = vsel %vm2776, %v2833, %v2835
        %v2837 = vrot.slane %v1728, 7
        %v2838 = vrot.slane %v1729, 7
        %v2839 = vsel %vm2776, %v2837, %v2838
        %v2840 = vrot.slane %v1730, 7
        %v2841 = vsel %vm2776, %v2838, %v2840
        %v2842 = vrot.slane %v1731, 7
        %v2843 = vrot.slane %v1732, 7
        %v2844 = vsel %vm2776, %v2842, %v2843
        %v2845 = vrot.slane %v1733, 7
        %v2846 = vsel %vm2776, %v2843, %v2845
        %v2847 = vrot.slane %v1734, 7
        %v2848 = vrot.slane %v1735, 7
        %v2849 = vsel %vm2776, %v2847, %v2848
        %v2850 = vrot.slane %v1736, 7
        %v2851 = vsel %vm2776, %v2848, %v2850
        %v2852 = vrot.slane %v1737, 7
        %v2853 = vrot.slane %v1738, 7
        %v2854 = vsel %vm2776, %v2852, %v2853
        %v2855 = vrot.slane %v1739, 7
        %v2856 = vsel %vm2776, %v2853, %v2855
        %v2857 = vrot.slane %v1740, 7
        %v2858 = vrot.slane %v1741, 7
        %v2859 = vsel %vm2776, %v2857, %v2858
        %v2860 = vrot.slane %v1742, 7
        %v2861 = vsel %vm2776, %v2858, %v2860
        %v2862 = vrot.slane %v1743, 7
        %v2863 = vrot.slane %v1744, 7
        %v2864 = vsel %vm2776, %v2862, %v2863
        %v2865 = vrot.slane %v1745, 7
        %v2866 = vsel %vm2776, %v2863, %v2865
        %v2867 = vrot.slane %v1746, 7
        %v2868 = vrot.slane %v1747, 7
        %v2869 = vsel %vm2776, %v2867, %v2868
        %v2870 = vrot.slane %v1748, 7
        %v2871 = vsel %vm2776, %v2868, %v2870
        %v2872 = vrot.slane %v1749, 7
        %v2873 = vrot.slane %v1750, 7
        %v2874 = vsel %vm2776, %v2872, %v2873
        %v2875 = vrot.slane %v1751, 7
        %v2876 = vsel %vm2776, %v2873, %v2875
        %v2917 = vadd.f32 %v2736, %v2779
        %v2918 = vadd.f32 %v2737, %v2781
        %v2919 = vadd.f32 %v2738, %v2784
        %v2920 = vadd.f32 %v2739, %v2786
        %v2921 = vadd.f32 %v2740, %v2789
        %v2922 = vadd.f32 %v2741, %v2791
        %v2923 = vadd.f32 %v2742, %v2794
        %v2924 = vadd.f32 %v2743, %v2796
        %v2925 = vadd.f32 %v2744, %v2799
        %v2926 = vadd.f32 %v2745, %v2801
        %v2927 = vadd.f32 %v2746, %v2804
        %v2928 = vadd.f32 %v2747, %v2806
        %v2929 = vadd.f32 %v2748, %v2809
        %v2930 = vadd.f32 %v2749, %v2811
        %v2931 = vadd.f32 %v2750, %v2814
        %v2932 = vadd.f32 %v2751, %v2816
        %v2933 = vadd.f32 %v2752, %v2819
        %v2934 = vadd.f32 %v2753, %v2821
        %v2935 = vadd.f32 %v2754, %v2824
        %v2936 = vadd.f32 %v2755, %v2826
        %v2937 = vadd.f32 %v2756, %v2829
        %v2938 = vadd.f32 %v2757, %v2831
        %v2939 = vadd.f32 %v2758, %v2834
        %v2940 = vadd.f32 %v2759, %v2836
        %v2941 = vadd.f32 %v2760, %v2839
        %v2942 = vadd.f32 %v2761, %v2841
        %v2943 = vadd.f32 %v2762, %v2844
        %v2944 = vadd.f32 %v2763, %v2846
        %v2945 = vadd.f32 %v2764, %v2849
        %v2946 = vadd.f32 %v2765, %v2851
        %v2947 = vadd.f32 %v2766, %v2854
        %v2948 = vadd.f32 %v2767, %v2856
        %v2949 = vadd.f32 %v2768, %v2859
        %v2950 = vadd.f32 %v2769, %v2861
        %v2951 = vadd.f32 %v2770, %v2864
        %v2952 = vadd.f32 %v2771, %v2866
        %v2953 = vadd.f32 %v2772, %v2869
        %v2954 = vadd.f32 %v2773, %v2871
        %v2955 = vadd.f32 %v2774, %v2874
        %v2956 = vadd.f32 %v2775, %v2876
        %v2957 = vadd.f32 %v2917, %v1392
        %v2958 = vadd.f32 %v2918, %v1393
        %v2959 = vadd.f32 %v2919, %v1395
        %v2960 = vadd.f32 %v2920, %v1396
        %v2961 = vadd.f32 %v2921, %v1398
        %v2962 = vadd.f32 %v2922, %v1399
        %v2963 = vadd.f32 %v2923, %v1401
        %v2964 = vadd.f32 %v2924, %v1402
        %v2965 = vadd.f32 %v2925, %v1404
        %v2966 = vadd.f32 %v2926, %v1405
        %v2967 = vadd.f32 %v2927, %v1407
        %v2968 = vadd.f32 %v2928, %v1408
        %v2969 = vadd.f32 %v2929, %v1410
        %v2970 = vadd.f32 %v2930, %v1411
        %v2971 = vadd.f32 %v2931, %v1413
        %v2972 = vadd.f32 %v2932, %v1414
        %v2973 = vadd.f32 %v2933, %v1416
        %v2974 = vadd.f32 %v2934, %v1417
        %v2975 = vadd.f32 %v2935, %v1419
        %v2976 = vadd.f32 %v2936, %v1420
        %v2977 = vadd.f32 %v2937, %v1422
        %v2978 = vadd.f32 %v2938, %v1423
        %v2979 = vadd.f32 %v2939, %v1425
        %v2980 = vadd.f32 %v2940, %v1426
        %v2981 = vadd.f32 %v2941, %v1428
        %v2982 = vadd.f32 %v2942, %v1429
        %v2983 = vadd.f32 %v2943, %v1431
        %v2984 = vadd.f32 %v2944, %v1432
        %v2985 = vadd.f32 %v2945, %v1434
        %v2986 = vadd.f32 %v2946, %v1435
        %v2987 = vadd.f32 %v2947, %v1437
        %v2988 = vadd.f32 %v2948, %v1438
        %v2989 = vadd.f32 %v2949, %v1440
        %v2990 = vadd.f32 %v2950, %v1441
        %v2991 = vadd.f32 %v2951, %v1443
        %v2992 = vadd.f32 %v2952, %v1444
        %v2993 = vadd.f32 %v2953, %v1446
        %v2994 = vadd.f32 %v2954, %v1447
        %v2995 = vadd.f32 %v2955, %v1449
        %v2996 = vadd.f32 %v2956, %v1450
        %v2997 = vmul.f32 %v667, 0.007598758
        %v2998 = vmul.f32 %v687, 0.007598758
        %v2999 = vmul.f32 %v707, 0.007598758
        %v3000 = vmul.f32 %v727, 0.007598758
        %v3001 = vmul.f32 %v747, 0.007598758
        %v3002 = vmul.f32 %v767, 0.007598758
        %v3003 = vmul.f32 %v787, 0.007598758
        %v3004 = vmul.f32 %v807, 0.007598758
        %v3005 = vmul.f32 %v827, 0.007598758
        %v3006 = vmul.f32 %v847, 0.007598758
        %v3007 = vmul.f32 %v867, 0.007598758
        %v3008 = vmul.f32 %v887, 0.007598758
        %v3009 = vmul.f32 %v907, 0.007598758
        %v3010 = vmul.f32 %v927, 0.007598758
        %v3011 = vmul.f32 %v947, 0.007598758
        %v3012 = vmul.f32 %v967, 0.007598758
        %v3013 = vmul.f32 %v987, 0.007598758
        %v3014 = vmul.f32 %v1007, 0.007598758
        %v3015 = vmul.f32 %v1027, 0.007598758
        %v3016 = vmul.f32 %v1047, 0.007598758
        %v3037 = vrot.slane %v2997, 1
        %v3038 = vsel %vm1210, %v1214, %v3037
        %v3039 = vrot.slane %v2998, 1
        %v3040 = vsel %vm1210, %v1219, %v3039
        %v3041 = vrot.slane %v2999, 1
        %v3042 = vsel %vm1210, %v1224, %v3041
        %v3043 = vrot.slane %v3000, 1
        %v3044 = vsel %vm1210, %v1229, %v3043
        %v3045 = vrot.slane %v3001, 1
        %v3046 = vsel %vm1210, %v1234, %v3045
        %v3047 = vrot.slane %v3002, 1
        %v3048 = vsel %vm1210, %v1239, %v3047
        %v3049 = vrot.slane %v3003, 1
        %v3050 = vsel %vm1210, %v1244, %v3049
        %v3051 = vrot.slane %v3004, 1
        %v3052 = vsel %vm1210, %v1249, %v3051
        %v3053 = vrot.slane %v3005, 1
        %v3054 = vsel %vm1210, %v1254, %v3053
        %v3055 = vrot.slane %v3006, 1
        %v3056 = vsel %vm1210, %v1259, %v3055
        %v3057 = vrot.slane %v3007, 1
        %v3058 = vsel %vm1210, %v1264, %v3057
        %v3059 = vrot.slane %v3008, 1
        %v3060 = vsel %vm1210, %v1269, %v3059
        %v3061 = vrot.slane %v3009, 1
        %v3062 = vsel %vm1210, %v1274, %v3061
        %v3063 = vrot.slane %v3010, 1
        %v3064 = vsel %vm1210, %v1279, %v3063
        %v3065 = vrot.slane %v3011, 1
        %v3066 = vsel %vm1210, %v1284, %v3065
        %v3067 = vrot.slane %v3012, 1
        %v3068 = vsel %vm1210, %v1289, %v3067
        %v3069 = vrot.slane %v3013, 1
        %v3070 = vsel %vm1210, %v1294, %v3069
        %v3071 = vrot.slane %v3014, 1
        %v3072 = vsel %vm1210, %v1299, %v3071
        %v3073 = vrot.slane %v3015, 1
        %v3074 = vsel %vm1210, %v1304, %v3073
        %v3075 = vrot.slane %v3016, 1
        %v3076 = vsel %vm1210, %v1309, %v3075
        %v3097 = vadd.f32 %v2957, %v1215
        %v3098 = vadd.f32 %v2958, %v3038
        %v3099 = vadd.f32 %v2959, %v1220
        %v3100 = vadd.f32 %v2960, %v3040
        %v3101 = vadd.f32 %v2961, %v1225
        %v3102 = vadd.f32 %v2962, %v3042
        %v3103 = vadd.f32 %v2963, %v1230
        %v3104 = vadd.f32 %v2964, %v3044
        %v3105 = vadd.f32 %v2965, %v1235
        %v3106 = vadd.f32 %v2966, %v3046
        %v3107 = vadd.f32 %v2967, %v1240
        %v3108 = vadd.f32 %v2968, %v3048
        %v3109 = vadd.f32 %v2969, %v1245
        %v3110 = vadd.f32 %v2970, %v3050
        %v3111 = vadd.f32 %v2971, %v1250
        %v3112 = vadd.f32 %v2972, %v3052
        %v3113 = vadd.f32 %v2973, %v1255
        %v3114 = vadd.f32 %v2974, %v3054
        %v3115 = vadd.f32 %v2975, %v1260
        %v3116 = vadd.f32 %v2976, %v3056
        %v3117 = vadd.f32 %v2977, %v1265
        %v3118 = vadd.f32 %v2978, %v3058
        %v3119 = vadd.f32 %v2979, %v1270
        %v3120 = vadd.f32 %v2980, %v3060
        %v3121 = vadd.f32 %v2981, %v1275
        %v3122 = vadd.f32 %v2982, %v3062
        %v3123 = vadd.f32 %v2983, %v1280
        %v3124 = vadd.f32 %v2984, %v3064
        %v3125 = vadd.f32 %v2985, %v1285
        %v3126 = vadd.f32 %v2986, %v3066
        %v3127 = vadd.f32 %v2987, %v1290
        %v3128 = vadd.f32 %v2988, %v3068
        %v3129 = vadd.f32 %v2989, %v1295
        %v3130 = vadd.f32 %v2990, %v3070
        %v3131 = vadd.f32 %v2991, %v1300
        %v3132 = vadd.f32 %v2992, %v3072
        %v3133 = vadd.f32 %v2993, %v1305
        %v3134 = vadd.f32 %v2994, %v3074
        %v3135 = vadd.f32 %v2995, %v1310
        %v3136 = vadd.f32 %v2996, %v3076
        %v3137 = vmul.f32 %v662, 0.0010283801
        %v3138 = vmul.f32 %v667, 0.0010283801
        %v3139 = vmul.f32 %v682, 0.0010283801
        %v3140 = vmul.f32 %v687, 0.0010283801
        %v3141 = vmul.f32 %v702, 0.0010283801
        %v3142 = vmul.f32 %v707, 0.0010283801
        %v3143 = vmul.f32 %v722, 0.0010283801
        %v3144 = vmul.f32 %v727, 0.0010283801
        %v3145 = vmul.f32 %v742, 0.0010283801
        %v3146 = vmul.f32 %v747, 0.0010283801
        %v3147 = vmul.f32 %v762, 0.0010283801
        %v3148 = vmul.f32 %v767, 0.0010283801
        %v3149 = vmul.f32 %v782, 0.0010283801
        %v3150 = vmul.f32 %v787, 0.0010283801
        %v3151 = vmul.f32 %v802, 0.0010283801
        %v3152 = vmul.f32 %v807, 0.0010283801
        %v3153 = vmul.f32 %v822, 0.0010283801
        %v3154 = vmul.f32 %v827, 0.0010283801
        %v3155 = vmul.f32 %v842, 0.0010283801
        %v3156 = vmul.f32 %v847, 0.0010283801
        %v3157 = vmul.f32 %v862, 0.0010283801
        %v3158 = vmul.f32 %v867, 0.0010283801
        %v3159 = vmul.f32 %v882, 0.0010283801
        %v3160 = vmul.f32 %v887, 0.0010283801
        %v3161 = vmul.f32 %v902, 0.0010283801
        %v3162 = vmul.f32 %v907, 0.0010283801
        %v3163 = vmul.f32 %v922, 0.0010283801
        %v3164 = vmul.f32 %v927, 0.0010283801
        %v3165 = vmul.f32 %v942, 0.0010283801
        %v3166 = vmul.f32 %v947, 0.0010283801
        %v3167 = vmul.f32 %v962, 0.0010283801
        %v3168 = vmul.f32 %v967, 0.0010283801
        %v3169 = vmul.f32 %v982, 0.0010283801
        %v3170 = vmul.f32 %v987, 0.0010283801
        %v3171 = vmul.f32 %v1002, 0.0010283801
        %v3172 = vmul.f32 %v1007, 0.0010283801
        %v3173 = vmul.f32 %v1022, 0.0010283801
        %v3174 = vmul.f32 %v1027, 0.0010283801
        %v3175 = vmul.f32 %v1042, 0.0010283801
        %v3176 = vmul.f32 %v1047, 0.0010283801
        %v3237 = vrot.slane %v1051, 2
        %v3238 = vrot.slane %v3137, 2
        %v3239 = vsel %vm1511, %v3237, %v3238
        %v3240 = vrot.slane %v3138, 2
        %v3241 = vsel %vm1511, %v3238, %v3240
        %v3242 = vrot.slane %v1053, 2
        %v3243 = vrot.slane %v3139, 2
        %v3244 = vsel %vm1511, %v3242, %v3243
        %v3245 = vrot.slane %v3140, 2
        %v3246 = vsel %vm1511, %v3243, %v3245
        %v3247 = vrot.slane %v1055, 2
        %v3248 = vrot.slane %v3141, 2
        %v3249 = vsel %vm1511, %v3247, %v3248
        %v3250 = vrot.slane %v3142, 2
        %v3251 = vsel %vm1511, %v3248, %v3250
        %v3252 = vrot.slane %v1057, 2
        %v3253 = vrot.slane %v3143, 2
        %v3254 = vsel %vm1511, %v3252, %v3253
        %v3255 = vrot.slane %v3144, 2
        %v3256 = vsel %vm1511, %v3253, %v3255
        %v3257 = vrot.slane %v1059, 2
        %v3258 = vrot.slane %v3145, 2
        %v3259 = vsel %vm1511, %v3257, %v3258
        %v3260 = vrot.slane %v3146, 2
        %v3261 = vsel %vm1511, %v3258, %v3260
        %v3262 = vrot.slane %v1061, 2
        %v3263 = vrot.slane %v3147, 2
        %v3264 = vsel %vm1511, %v3262, %v3263
        %v3265 = vrot.slane %v3148, 2
        %v3266 = vsel %vm1511, %v3263, %v3265
        %v3267 = vrot.slane %v1063, 2
        %v3268 = vrot.slane %v3149, 2
        %v3269 = vsel %vm1511, %v3267, %v3268
        %v3270 = vrot.slane %v3150, 2
        %v3271 = vsel %vm1511, %v3268, %v3270
        %v3272 = vrot.slane %v1065, 2
        %v3273 = vrot.slane %v3151, 2
        %v3274 = vsel %vm1511, %v3272, %v3273
        %v3275 = vrot.slane %v3152, 2
        %v3276 = vsel %vm1511, %v3273, %v3275
        %v3277 = vrot.slane %v1067, 2
        %v3278 = vrot.slane %v3153, 2
        %v3279 = vsel %vm1511, %v3277, %v3278
        %v3280 = vrot.slane %v3154, 2
        %v3281 = vsel %vm1511, %v3278, %v3280
        %v3282 = vrot.slane %v1069, 2
        %v3283 = vrot.slane %v3155, 2
        %v3284 = vsel %vm1511, %v3282, %v3283
        %v3285 = vrot.slane %v3156, 2
        %v3286 = vsel %vm1511, %v3283, %v3285
        %v3287 = vrot.slane %v1071, 2
        %v3288 = vrot.slane %v3157, 2
        %v3289 = vsel %vm1511, %v3287, %v3288
        %v3290 = vrot.slane %v3158, 2
        %v3291 = vsel %vm1511, %v3288, %v3290
        %v3292 = vrot.slane %v1073, 2
        %v3293 = vrot.slane %v3159, 2
        %v3294 = vsel %vm1511, %v3292, %v3293
        %v3295 = vrot.slane %v3160, 2
        %v3296 = vsel %vm1511, %v3293, %v3295
        %v3297 = vrot.slane %v1075, 2
        %v3298 = vrot.slane %v3161, 2
        %v3299 = vsel %vm1511, %v3297, %v3298
        %v3300 = vrot.slane %v3162, 2
        %v3301 = vsel %vm1511, %v3298, %v3300
        %v3302 = vrot.slane %v1077, 2
        %v3303 = vrot.slane %v3163, 2
        %v3304 = vsel %vm1511, %v3302, %v3303
        %v3305 = vrot.slane %v3164, 2
        %v3306 = vsel %vm1511, %v3303, %v3305
        %v3307 = vrot.slane %v1079, 2
        %v3308 = vrot.slane %v3165, 2
        %v3309 = vsel %vm1511, %v3307, %v3308
        %v3310 = vrot.slane %v3166, 2
        %v3311 = vsel %vm1511, %v3308, %v3310
        %v3312 = vrot.slane %v1081, 2
        %v3313 = vrot.slane %v3167, 2
        %v3314 = vsel %vm1511, %v3312, %v3313
        %v3315 = vrot.slane %v3168, 2
        %v3316 = vsel %vm1511, %v3313, %v3315
        %v3317 = vrot.slane %v1083, 2
        %v3318 = vrot.slane %v3169, 2
        %v3319 = vsel %vm1511, %v3317, %v3318
        %v3320 = vrot.slane %v3170, 2
        %v3321 = vsel %vm1511, %v3318, %v3320
        %v3322 = vrot.slane %v1085, 2
        %v3323 = vrot.slane %v3171, 2
        %v3324 = vsel %vm1511, %v3322, %v3323
        %v3325 = vrot.slane %v3172, 2
        %v3326 = vsel %vm1511, %v3323, %v3325
        %v3327 = vrot.slane %v1087, 2
        %v3328 = vrot.slane %v3173, 2
        %v3329 = vsel %vm1511, %v3327, %v3328
        %v3330 = vrot.slane %v3174, 2
        %v3331 = vsel %vm1511, %v3328, %v3330
        %v3332 = vrot.slane %v1089, 2
        %v3333 = vrot.slane %v3175, 2
        %v3334 = vsel %vm1511, %v3332, %v3333
        %v3335 = vrot.slane %v3176, 2
        %v3336 = vsel %vm1511, %v3333, %v3335
        %v3377 = vadd.f32 %v3097, %v3239
        %v3378 = vadd.f32 %v3098, %v3241
        %v3379 = vadd.f32 %v3099, %v3244
        %v3380 = vadd.f32 %v3100, %v3246
        %v3381 = vadd.f32 %v3101, %v3249
        %v3382 = vadd.f32 %v3102, %v3251
        %v3383 = vadd.f32 %v3103, %v3254
        %v3384 = vadd.f32 %v3104, %v3256
        %v3385 = vadd.f32 %v3105, %v3259
        %v3386 = vadd.f32 %v3106, %v3261
        %v3387 = vadd.f32 %v3107, %v3264
        %v3388 = vadd.f32 %v3108, %v3266
        %v3389 = vadd.f32 %v3109, %v3269
        %v3390 = vadd.f32 %v3110, %v3271
        %v3391 = vadd.f32 %v3111, %v3274
        %v3392 = vadd.f32 %v3112, %v3276
        %v3393 = vadd.f32 %v3113, %v3279
        %v3394 = vadd.f32 %v3114, %v3281
        %v3395 = vadd.f32 %v3115, %v3284
        %v3396 = vadd.f32 %v3116, %v3286
        %v3397 = vadd.f32 %v3117, %v3289
        %v3398 = vadd.f32 %v3118, %v3291
        %v3399 = vadd.f32 %v3119, %v3294
        %v3400 = vadd.f32 %v3120, %v3296
        %v3401 = vadd.f32 %v3121, %v3299
        %v3402 = vadd.f32 %v3122, %v3301
        %v3403 = vadd.f32 %v3123, %v3304
        %v3404 = vadd.f32 %v3124, %v3306
        %v3405 = vadd.f32 %v3125, %v3309
        %v3406 = vadd.f32 %v3126, %v3311
        %v3407 = vadd.f32 %v3127, %v3314
        %v3408 = vadd.f32 %v3128, %v3316
        %v3409 = vadd.f32 %v3129, %v3319
        %v3410 = vadd.f32 %v3130, %v3321
        %v3411 = vadd.f32 %v3131, %v3324
        %v3412 = vadd.f32 %v3132, %v3326
        %v3413 = vadd.f32 %v3133, %v3329
        %v3414 = vadd.f32 %v3134, %v3331
        %v3415 = vadd.f32 %v3135, %v3334
        %v3416 = vadd.f32 %v3136, %v3336
        %v3417 = vmul.f32 %v3377, %v3377
        %v3418 = vmul.f32 %v3378, %v3378
        %v3419 = vmul.f32 %v3379, %v3379
        %v3420 = vmul.f32 %v3380, %v3380
        %v3421 = vmul.f32 %v3381, %v3381
        %v3422 = vmul.f32 %v3382, %v3382
        %v3423 = vmul.f32 %v3383, %v3383
        %v3424 = vmul.f32 %v3384, %v3384
        %v3425 = vmul.f32 %v3385, %v3385
        %v3426 = vmul.f32 %v3386, %v3386
        %v3427 = vmul.f32 %v3387, %v3387
        %v3428 = vmul.f32 %v3388, %v3388
        %v3429 = vmul.f32 %v3389, %v3389
        %v3430 = vmul.f32 %v3390, %v3390
        %v3431 = vmul.f32 %v3391, %v3391
        %v3432 = vmul.f32 %v3392, %v3392
        %v3433 = vmul.f32 %v3377, %v3385
        %v3434 = vmul.f32 %v3378, %v3386
        %v3435 = vmul.f32 %v3379, %v3387
        %v3436 = vmul.f32 %v3380, %v3388
        %v3437 = vmul.f32 %v3381, %v3389
        %v3438 = vmul.f32 %v3382, %v3390
        %v3439 = vmul.f32 %v3383, %v3391
        %v3440 = vmul.f32 %v3384, %v3392
        %v3441 = vsub.f32 %v3393, %v3417
        %v3442 = vsub.f32 %v3394, %v3418
        %v3443 = vsub.f32 %v3395, %v3419
        %v3444 = vsub.f32 %v3396, %v3420
        %v3445 = vsub.f32 %v3397, %v3421
        %v3446 = vsub.f32 %v3398, %v3422
        %v3447 = vsub.f32 %v3399, %v3423
        %v3448 = vsub.f32 %v3400, %v3424
        %v3449 = vsub.f32 %v3401, %v3425
        %v3450 = vsub.f32 %v3402, %v3426
        %v3451 = vsub.f32 %v3403, %v3427
        %v3452 = vsub.f32 %v3404, %v3428
        %v3453 = vsub.f32 %v3405, %v3429
        %v3454 = vsub.f32 %v3406, %v3430
        %v3455 = vsub.f32 %v3407, %v3431
        %v3456 = vsub.f32 %v3408, %v3432
        %v3457 = vsub.f32 %v3409, %v3433
        %v3458 = vsub.f32 %v3410, %v3434
        %v3459 = vsub.f32 %v3411, %v3435
        %v3460 = vsub.f32 %v3412, %v3436
        %v3461 = vsub.f32 %v3413, %v3437
        %v3462 = vsub.f32 %v3414, %v3438
        %v3463 = vsub.f32 %v3415, %v3439
        %v3464 = vsub.f32 %v3416, %v3440
        %v3465 = vmul.f32 %v3433, 2.0
        %v3466 = vmul.f32 %v3434, 2.0
        %v3467 = vmul.f32 %v3435, 2.0
        %v3468 = vmul.f32 %v3436, 2.0
        %v3469 = vmul.f32 %v3437, 2.0
        %v3470 = vmul.f32 %v3438, 2.0
        %v3471 = vmul.f32 %v3439, 2.0
        %v3472 = vmul.f32 %v3440, 2.0
        %v3473 = vadd.f32 %v3465, 0.0001
        %v3474 = vadd.f32 %v3466, 0.0001
        %v3475 = vadd.f32 %v3467, 0.0001
        %v3476 = vadd.f32 %v3468, 0.0001
        %v3477 = vadd.f32 %v3469, 0.0001
        %v3478 = vadd.f32 %v3470, 0.0001
        %v3479 = vadd.f32 %v3471, 0.0001
        %v3480 = vadd.f32 %v3472, 0.0001
        %v3481 = vmul.f32 %v3457, 2.0
        %v3482 = vmul.f32 %v3458, 2.0
        %v3483 = vmul.f32 %v3459, 2.0
        %v3484 = vmul.f32 %v3460, 2.0
        %v3485 = vmul.f32 %v3461, 2.0
        %v3486 = vmul.f32 %v3462, 2.0
        %v3487 = vmul.f32 %v3463, 2.0
        %v3488 = vmul.f32 %v3464, 2.0
        %v3489 = vadd.f32 %v3481, 0.0009
        %v3490 = vadd.f32 %v3482, 0.0009
        %v3491 = vadd.f32 %v3483, 0.0009
        %v3492 = vadd.f32 %v3484, 0.0009
        %v3493 = vadd.f32 %v3485, 0.0009
        %v3494 = vadd.f32 %v3486, 0.0009
        %v3495 = vadd.f32 %v3487, 0.0009
        %v3496 = vadd.f32 %v3488, 0.0009
        %v3497 = vmul.f32 %v3473, %v3489
        %v3498 = vmul.f32 %v3474, %v3490
        %v3499 = vmul.f32 %v3475, %v3491
        %v3500 = vmul.f32 %v3476, %v3492
        %v3501 = vmul.f32 %v3477, %v3493
        %v3502 = vmul.f32 %v3478, %v3494
        %v3503 = vmul.f32 %v3479, %v3495
        %v3504 = vmul.f32 %v3480, %v3496
        %v3505 = vadd.f32 %v3417, %v3425
        %v3506 = vadd.f32 %v3418, %v3426
        %v3507 = vadd.f32 %v3419, %v3427
        %v3508 = vadd.f32 %v3420, %v3428
        %v3509 = vadd.f32 %v3421, %v3429
        %v3510 = vadd.f32 %v3422, %v3430
        %v3511 = vadd.f32 %v3423, %v3431
        %v3512 = vadd.f32 %v3424, %v3432
        %v3513 = vadd.f32 %v3505, 0.0001
        %v3514 = vadd.f32 %v3506, 0.0001
        %v3515 = vadd.f32 %v3507, 0.0001
        %v3516 = vadd.f32 %v3508, 0.0001
        %v3517 = vadd.f32 %v3509, 0.0001
        %v3518 = vadd.f32 %v3510, 0.0001
        %v3519 = vadd.f32 %v3511, 0.0001
        %v3520 = vadd.f32 %v3512, 0.0001
        %v3521 = vadd.f32 %v3441, %v3449
        %v3522 = vadd.f32 %v3442, %v3450
        %v3523 = vadd.f32 %v3443, %v3451
        %v3524 = vadd.f32 %v3444, %v3452
        %v3525 = vadd.f32 %v3445, %v3453
        %v3526 = vadd.f32 %v3446, %v3454
        %v3527 = vadd.f32 %v3447, %v3455
        %v3528 = vadd.f32 %v3448, %v3456
        %v3529 = vadd.f32 %v3521, 0.0009
        %v3530 = vadd.f32 %v3522, 0.0009
        %v3531 = vadd.f32 %v3523, 0.0009
        %v3532 = vadd.f32 %v3524, 0.0009
        %v3533 = vadd.f32 %v3525, 0.0009
        %v3534 = vadd.f32 %v3526, 0.0009
        %v3535 = vadd.f32 %v3527, 0.0009
        %v3536 = vadd.f32 %v3528, 0.0009
        %v3537 = vmul.f32 %v3513, %v3529
        %v3538 = vmul.f32 %v3514, %v3530
        %v3539 = vmul.f32 %v3515, %v3531
        %v3540 = vmul.f32 %v3516, %v3532
        %v3541 = vmul.f32 %v3517, %v3533
        %v3542 = vmul.f32 %v3518, %v3534
        %v3543 = vmul.f32 %v3519, %v3535
        %v3544 = vmul.f32 %v3520, %v3536
        %v3545 = vrcp.pop %v3537
        %v3546 = vmul.f32 %v3497, %v3545
        %v3547 = vrcp.pop %v3538
        %v3548 = vmul.f32 %v3498, %v3547
        %v3549 = vrcp.pop %v3539
        %v3550 = vmul.f32 %v3499, %v3549
        %v3551 = vrcp.pop %v3540
        %v3552 = vmul.f32 %v3500, %v3551
        %v3553 = vrcp.pop %v3541
        %v3554 = vmul.f32 %v3501, %v3553
        %v3555 = vrcp.pop %v3542
        %v3556 = vmul.f32 %v3502, %v3555
        %v3557 = vrcp.pop %v3543
        %v3558 = vmul.f32 %v3503, %v3557
        %v3559 = vrcp.pop %v3544
        %v3560 = vmul.f32 %v3504, %v3559
        %v3561 = vmax.f32 %v3546, 0.0
        %v3562 = vmax.f32 %v3548, 0.0
        %v3563 = vmax.f32 %v3550, 0.0
        %v3564 = vmax.f32 %v3552, 0.0
        %v3565 = vmax.f32 %v3554, 0.0
        %v3566 = vmax.f32 %v3556, 0.0
        %v3567 = vmax.f32 %v3558, 0.0
        %v3568 = vmax.f32 %v3560, 0.0
        %v3569 = vmin.f32 %v3561, 1.0
        %v3570 = vmin.f32 %v3562, 1.0
        %v3571 = vmin.f32 %v3563, 1.0
        %v3572 = vmin.f32 %v3564, 1.0
        %v3573 = vmin.f32 %v3565, 1.0
        %v3574 = vmin.f32 %v3566, 1.0
        %v3575 = vmin.f32 %v3567, 1.0
        %v3576 = vmin.f32 %v3568, 1.0
        %v3577 = vsel %vm344, %v3569, 0.0
        %3578 = vadd.xlane.f32.xlu0 %v3577
        %v3579 = vpop.xlane.xlu0 %3578
        %v3580 = vsel %vm344, %v3570, 0.0
        %3581 = vadd.xlane.f32.xlu0 %v3580
        %v3582 = vpop.xlane.xlu0 %3581
        %v3583 = vsel %vm344, %v3571, 0.0
        %3584 = vadd.xlane.f32.xlu0 %v3583
        %v3585 = vpop.xlane.xlu0 %3584
        %v3586 = vsel %vm344, %v3572, 0.0
        %3587 = vadd.xlane.f32.xlu0 %v3586
        %v3588 = vpop.xlane.xlu0 %3587
        %v3589 = vsel %vm344, %v3573, 0.0
        %3590 = vadd.xlane.f32.xlu0 %v3589
        %v3591 = vpop.xlane.xlu0 %3590
        %v3592 = vsel %vm344, %v3574, 0.0
        %3593 = vadd.xlane.f32.xlu0 %v3592
        %v3594 = vpop.xlane.xlu0 %3593
        %v3595 = vsel %vm344, %v3575, 0.0
        %3596 = vadd.xlane.f32.xlu0 %v3595
        %v3597 = vpop.xlane.xlu0 %3596
        %v3598 = vsel %vm344, %v3576, 0.0
        %3599 = vadd.xlane.f32.xlu0 %v3598
        %v3600 = vpop.xlane.xlu0 %3599
        %v3609 = vlaneseq
        %v3610 = vand.u32 %v3609, 127
        %v3611 = vlaneseq
        %v3612 = vshrl.u32 %v3611, 7
        %v3613 = vsub.s32 %v3610, %v3612
        %v3614 = vrot.slane %v3579, %v3613
        %v3615 = vadd.s32 %v3610, 4294967288
        %v3616 = vlaneseq
        %v3617 = vshrl.u32 %v3616, 7
        %v3618 = vsub.s32 %v3615, %v3617
        %v3619 = vrot.slane %v3582, %v3618
        %vm3620 = vcmask 130112
        %v3621 = vsel %vm3620, %v3619, %v3614
        %v3622 = vlaneseq
        %v3623 = vshrl.u32 %v3622, 7
        %v3624 = vsub.s32 %v3610, %v3623
        %v3625 = vrot.slane %v3585, %v3624
        %v3626 = vlaneseq
        %v3627 = vshrl.u32 %v3626, 7
        %v3628 = vsub.s32 %v3615, %v3627
        %v3629 = vrot.slane %v3588, %v3628
        %v3630 = vsel %vm3620, %v3629, %v3625
        %v3631 = vlaneseq
        %v3632 = vshrl.u32 %v3631, 7
        %v3633 = vsub.s32 %v3610, %v3632
        %v3634 = vrot.slane %v3591, %v3633
        %v3635 = vlaneseq
        %v3636 = vshrl.u32 %v3635, 7
        %v3637 = vsub.s32 %v3615, %v3636
        %v3638 = vrot.slane %v3594, %v3637
        %v3639 = vsel %vm3620, %v3638, %v3634
        %v3640 = vlaneseq
        %v3641 = vshrl.u32 %v3640, 7
        %v3642 = vsub.s32 %v3610, %v3641
        %v3643 = vrot.slane %v3597, %v3642
        %v3644 = vlaneseq
        %v3645 = vshrl.u32 %v3644, 7
        %v3646 = vsub.s32 %v3615, %v3645
        %v3647 = vrot.slane %v3600, %v3646
        %v3648 = vsel %vm3620, %v3647, %v3643
        %vm3649 = vcmask 1041409
        %v3650 = vsel %vm3649, %v3630, %v3621
        %vm3651 = vcmask 1042434
        %v3652 = vsel %vm3651, %v3639, %v3650
        %vm3653 = vcmask 1043459
        %v3654 = vsel %vm3653, %v3648, %v3652
        %vm3656 = vcmask 125952
        %v3657 = vsel %vm3656, %v3654, 0.0
        %3658 = vadd.xlane.f32.xlu0 %v3657
        %v3659 = vpop.xlane.xlu0 %3658
        %v3661 = vlaneseq
        %v3662 = vshrl.u32 %v3661, 7
        %v3663 = vsub.s32 %v3610, %v3662
        %v3664 = vrot.slane %v3659, %v3663
        %vm3666 = vcmask 24576
        %3667 = vst.msk [vmem:[%s183] sm:$0x1] %vm3666, %v3664
        %s3668 = sand.u32 %s98, 1
        %s3669 = scalar_lea.sflag [#allocation3], %s3668
        %s3670 = sand.u32 %s98, 1
        %s3671 = scalar_lea.vmem [#allocation2], %s3670
        // Predicated region
        $region33: #{tpu_custom_call.1} parent=31 // pred_check
          %p3672 = pneg %p108
        $region34: #{tpu_custom_call.1} parent=31 // pred_check_branch
          %3674 = sbr.rel (%p3672) target = $region36
        $region35: #{tpu_custom_call.1} parent=31 // pred_region
          %s3676 = ssub.s32 16, 16
          %3677 = vsyncadd %s3669, %s3676
          %s3678 = smul.addr %s17, 16
          %s3679 = scalar_lea.hbm %s3, %s3678
          %s3681 = sshll.u32 %s3671, 4
          %s3682 = int_to_ptr.vmem [resolvable:$true] %s3681
          %3684 = dma.vmem_to_hbm [thread:$0]  %s3682, 16, %s3679, %s3669
        $region36: #{tpu_custom_call.1} parent=31 // pred_fallthru
          _
      $region32: #{tpu_custom_call.1} parent=5 // pred_fallthru
        _
      %p3685 = scmp.le.s32.totalorder 2, %s12
      // Predicated region
      $region37: #{tpu_custom_call.1} parent=5 // pred_check
        %p3686 = pneg %p3685
      $region38: #{tpu_custom_call.1} parent=5 // pred_check_branch
        %3688 = sbr.rel (%p3686) target = $region40
      $region39: #{tpu_custom_call.1} parent=5 // pred_region
        %s3689 = ssub.s32 %s12, 2
        // Predicated region
        $region41: #{tpu_custom_call.1} parent=39 // pred_check
          %p3690 = pneg %p114
        $region42: #{tpu_custom_call.1} parent=39 // pred_check_branch
          %3692 = sbr.rel (%p3690) target = $region44
        $region43: #{tpu_custom_call.1} parent=39 // pred_region
          %s3693 = sand.u32 %s99, 1
          %s3694 = scalar_lea.sflag [#allocation3], %s3693
          %s3695 = sand.u32 %s99, 1
          %s3696 = scalar_lea.vmem [#allocation2], %s3695
          %3697 = dma.done %s3694, 16
        $region44: #{tpu_custom_call.1} parent=39 // pred_fallthru
          _
      $region40: #{tpu_custom_call.1} parent=5 // pred_fallthru
        _
    $region6: #{tpu_custom_call.1} parent=1 // loop_footer
      %s16 = sadd.s32 1, %s12
    $region7: #{tpu_custom_call.1} parent=1 // loop_footer_branch
      %11 = sbr.rel target = $region3
    $region8: #{tpu_custom_call.1} parent=1 // loop_exit
      _
    %3698 = vsyncpa [#allocation3], 1
    %s3699 = scalar_lea.sflag [#allocation3], 1
    %3700 = vsyncpa %s3699, 1

</llo_original>
